<compile_context>
chip_gen: v5e
topology: v5e:2x2
jax: 0.10.0
libtpu: 0.0.40
codegen_flags: <defaults>
</compile_context>

<pallas_src>
import math
import functools

import jax
import jax.numpy as jnp
from jax.experimental import pallas as pl
from jax.experimental.pallas import tpu as pltpu


# ----------------------------------------------------------------------------
# Kernel 1: single-layer LSTM recurrence over one batch tile.
#   x      : (Bb, T, H)   batch-first input tile
#   w_ih4  : (H, 4H)      fused input weights  (columns = [i|f|g|o])
#   w_hh4  : (H, 4H)      fused recurrent weights
#   b4     : (1, 4H)      b_ih + b_hh, fused
#   lens   : (Bb, 1) i32
#   out    : (Bb, T, H)   h_t, zeroed for t >= length (pad_packed_sequence)
# ----------------------------------------------------------------------------
def _lstm_kernel(x_ref, wih_ref, whh_ref, b_ref, lens_ref, out_ref, *, mxu_dtype):
    Bb, T, H = x_ref.shape

    wih = wih_ref[...].astype(mxu_dtype)            # (H, 4H), resident
    whh = whh_ref[...].astype(mxu_dtype)            # (H, 4H), resident
    b4 = b_ref[...]                                 # (1, 4H) f32
    lens = lens_ref[...]                            # (Bb, 1) int32, loaded once

    # Hoisted input projection: one big MXU matmul for all timesteps + gates,
    # bias added once.  (Bb*T, H) @ (H, 4H) -> (Bb, T, 4H).
    x2d = x_ref[...].reshape(Bb * T, H).astype(mxu_dtype)
    xp = jnp.dot(x2d, wih, preferred_element_type=jnp.float32)
    xp = xp.reshape(Bb, T, 4 * H) + b4              # (Bb, T, 4H) f32

    h = jnp.zeros((Bb, H), jnp.float32)
    c = jnp.zeros((Bb, H), jnp.float32)

    # Fully unrolled recurrence: h/c stay in vregs; one fused lane-dense
    # (Bb, H) @ (H, 4H) recurrent matmul per step; gate math stays f32 (VPU/EUP).
    for t in range(T):
        gates = xp[:, t, :] + jnp.dot(h.astype(mxu_dtype), whh,
                                      preferred_element_type=jnp.float32)
        i_g = jax.nn.sigmoid(gates[:, 0 * H:1 * H])
        f_g = jax.nn.sigmoid(gates[:, 1 * H:2 * H])
        g_g = jnp.tanh(gates[:, 2 * H:3 * H])
        o_g = jax.nn.sigmoid(gates[:, 3 * H:4 * H])
        c = f_g * c + i_g * g_g
        h = o_g * jnp.tanh(c)
        # pad_packed_sequence zeroing for t >= length (carry stays unmasked).
        out_ref[:, t, :] = jnp.where(t < lens, h, 0.0)


# ----------------------------------------------------------------------------
# Kernel 2: attention_net + fc head, per batch tile.
#   logits : (Bb, T, H)   masked LSTM outputs
#   w_fc   : (H, O)       fc weight, transposed
#   b_fc   : (1, O)
#   out    : (Bb, O)
# context = sum_t sum_s p[t,s] x[s] = (sum_t p_attn[:, t, :]) . x   (T-fold
# fewer FLOPs than the naive (B,T,H) intermediate, no big temporary).
# ----------------------------------------------------------------------------
def _attn_fc_kernel(logits_ref, wfc_ref, bfc_ref, out_ref):
    x = logits_ref[...]                              # (Bb, T, H), dropout = id
    d_k = x.shape[-1]

    scores = jnp.einsum('btd,bsd->bts', x, x,
                        preferred_element_type=jnp.float32) * (1.0 / math.sqrt(d_k))
    scores = scores - jnp.max(scores, axis=-1, keepdims=True)
    e = jnp.exp(scores)
    denom = jnp.sum(e, axis=-1, keepdims=True)
    p_attn = e * pl.reciprocal(denom, approx=True)   # softmax(dim=-1), EUP recip

    w = jnp.sum(p_attn, axis=1)                      # (Bb, S): sum over queries t
    context = jnp.sum(w[:, :, None] * x, axis=1)     # (Bb, H)

    out_ref[...] = (jnp.dot(context, wfc_ref[...],
                            preferred_element_type=jnp.float32)
                    + bfc_ref[...])


# ----------------------------------------------------------------------------
# Wrapper
# ----------------------------------------------------------------------------
def lstm_attention_forward(feature, lengths, params, *, block_b=None,
                           mxu_dtype=jnp.float32):
    B, T, H = feature.shape
    out_dim = params['fc_w'].shape[0]

    if block_b is None:
        block_b = B if B <= 8 else 8                 # batch tile (keeps VMEM bounded)
    assert B % block_b == 0
    nb = B // block_b

    # Fused gate weights: (H, 4H), PyTorch gate order i|f|g|o along columns.
    w_ih4 = params['w_ih'].T
    w_hh4 = params['w_hh'].T
    b4 = (params['b_ih'] + params['b_hh']).reshape(1, 4 * H)
    lens2d = lengths.reshape(B, 1).astype(jnp.int32)

    logits = pl.pallas_call(
        functools.partial(_lstm_kernel, mxu_dtype=mxu_dtype),
        out_shape=jax.ShapeDtypeStruct((B, T, H), jnp.float32),
        grid_spec=pltpu.PrefetchScalarGridSpec(
            num_scalar_prefetch=0,
            grid=(nb,),
            in_specs=[
                pl.BlockSpec((block_b, T, H), lambda i: (i, 0, 0)),
                pl.BlockSpec((H, 4 * H), lambda i: (0, 0)),
                pl.BlockSpec((H, 4 * H), lambda i: (0, 0)),
                pl.BlockSpec((1, 4 * H), lambda i: (0, 0)),
                pl.BlockSpec((block_b, 1), lambda i: (i, 0)),
            ],
            out_specs=pl.BlockSpec((block_b, T, H), lambda i: (i, 0, 0)),
        ),
        compiler_params=pltpu.CompilerParams(
            dimension_semantics=("parallel",)),      # batch tiles are independent
    )(feature, w_ih4, w_hh4, b4, lens2d)

    w_fc_t = params['fc_w'].T                        # (H, O)
    b_fc = params['fc_b'].reshape(1, out_dim)

    out = pl.pallas_call(
        _attn_fc_kernel,
        out_shape=jax.ShapeDtypeStruct((B, out_dim), jnp.float32),
        grid_spec=pltpu.PrefetchScalarGridSpec(
            num_scalar_prefetch=0,
            grid=(nb,),
            in_specs=[
                pl.BlockSpec((block_b, T, H), lambda i: (i, 0, 0)),
                pl.BlockSpec((H, out_dim), lambda i: (0, 0)),
                pl.BlockSpec((1, out_dim), lambda i: (0, 0)),
            ],
            out_specs=pl.BlockSpec((block_b, out_dim), lambda i: (i, 0)),
        ),
        compiler_params=pltpu.CompilerParams(
            dimension_semantics=("parallel",)),
    )(logits, w_fc_t, b_fc)
    return out


# ----------------------------------------------------------------------------
# Pure-JAX reference (mirrors PyTorch semantics) for verification.
# ----------------------------------------------------------------------------
def reference_forward(feature, lengths, params):
    B, T, H = feature.shape
    w_ih, w_hh = params['w_ih'], params['w_hh']
    b = params['b_ih'] + params['b_hh']

    def cell(carry, x_t):
        h, c = carry
        gates = x_t @ w_ih.T + h @ w_hh.T + b
        i, f, g, o = jnp.split(gates, 4, axis=-1)
        i, f, o = jax.nn.sigmoid(i), jax.nn.sigmoid(f), jax.nn.sigmoid(o)
        g = jnp.tanh(g)
        c = f * c + i * g
        h = o * jnp.tanh(c)
        return (h, c), h

    h0 = jnp.zeros((B, H), jnp.float32)
    _, hs = jax.lax.scan(cell, (h0, h0), jnp.transpose(feature, (1, 0, 2)))
    hs = jnp.transpose(hs, (1, 0, 2))                               # (B, T, H)
    mask = jnp.arange(T)[None, :, None] < lengths[:, None, None]
    logits = jnp.where(mask, hs, 0.0)

    q = logits
    scores = jnp.einsum('btd,bsd->bts', q, logits) / math.sqrt(H)
    p_attn = jax.nn.softmax(scores, axis=-1)
    context = jnp.einsum('bts,bsd->btd', p_attn, logits).sum(1)
    return context @ params['fc_w'].T + params['fc_b']


def init_params(key, h_size, out_dim):
    k = 1.0 / math.sqrt(h_size)
    keys = jax.random.split(key, 6)
    u = lambda kk, shape: jax.random.uniform(kk, shape, jnp.float32, -k, k)
    return {
        'w_ih': u(keys[0], (4 * h_size, h_size)),
        'w_hh': u(keys[1], (4 * h_size, h_size)),
        'b_ih': u(keys[2], (4 * h_size,)),
        'b_hh': u(keys[3], (4 * h_size,)),
        'fc_w': u(keys[4], (out_dim, h_size)),
        'fc_b': u(keys[5], (out_dim,)),
    }


if __name__ == "__main__":
    B, T, H = 4, 8, 32
    OUT_DIM = 2   # regression=False

    root = jax.random.PRNGKey(0)
    k_param, k_x = jax.random.split(root)
    params = init_params(k_param, H, OUT_DIM)

    feature = jax.random.normal(k_x, (B, T, H), jnp.float32)
    lengths = jnp.array([8, 5, 3, 7], dtype=jnp.int32)

    out = lstm_attention_forward(feature, lengths, params)
    out = jax.block_until_ready(out)

    ref = reference_forward(feature, lengths, params)
    assert out.shape == (B, OUT_DIM)
    # approx reciprocal in the softmax normalizer -> slightly looser tolerance
    assert jnp.allclose(out, ref, atol=2e-3, rtol=2e-3), (out, ref)

    print("KERNEL_OK")
</pallas_src>

<mosaic_0001>
module attributes {stable_mosaic.version = 11 : i64} {
  func.func @_lstm_kernel(%arg0: i32, %arg1: memref<4x8x32xf32, #tpu.memory_space<vmem>>, %arg2: memref<32x128xf32, #tpu.memory_space<vmem>>, %arg3: memref<32x128xf32, #tpu.memory_space<vmem>>, %arg4: memref<1x128xf32, #tpu.memory_space<vmem>>, %arg5: memref<4x1xi32, #tpu.memory_space<vmem>>, %arg6: memref<4x8x32xf32, #tpu.memory_space<vmem>>) attributes {dimension_semantics = [#tpu.dimension_semantics<parallel>], iteration_bounds = array<i64: 1>, scalar_prefetch = 0 : i64, scratch_operands = 0 : i64, tpu.core_type = #tpu.core_type<tc>, window_params = [{transform_indices = @transform_0, window_bounds = array<i64: 4, 8, 32>}, {pipeline_mode = #tpu.pipeline_mode<synchronous>, transform_indices = @transform_1, window_bounds = array<i64: 32, 128>}, {pipeline_mode = #tpu.pipeline_mode<synchronous>, transform_indices = @transform_2, window_bounds = array<i64: 32, 128>}, {pipeline_mode = #tpu.pipeline_mode<synchronous>, transform_indices = @transform_3, window_bounds = array<i64: 1, 128>}, {transform_indices = @transform_4, window_bounds = array<i64: 4, 1>}, {transform_indices = @transform_5, window_bounds = array<i64: 4, 8, 32>}]} {
    %c0 = arith.constant 0 : index
    %c0_0 = arith.constant 0 : index
    %0 = vector.load %arg2[%c0, %c0_0] : memref<32x128xf32, #tpu.memory_space<vmem>>, vector<32x128xf32>
    %c0_1 = arith.constant 0 : index
    %c0_2 = arith.constant 0 : index
    %1 = vector.load %arg3[%c0_1, %c0_2] : memref<32x128xf32, #tpu.memory_space<vmem>>, vector<32x128xf32>
    %c0_3 = arith.constant 0 : index
    %c0_4 = arith.constant 0 : index
    %2 = vector.load %arg4[%c0_3, %c0_4] : memref<1x128xf32, #tpu.memory_space<vmem>>, vector<1x128xf32>
    %c0_5 = arith.constant 0 : index
    %c0_6 = arith.constant 0 : index
    %3 = vector.load %arg5[%c0_5, %c0_6] : memref<4x1xi32, #tpu.memory_space<vmem>>, vector<4x1xi32>
    %c0_7 = arith.constant 0 : index
    %c0_8 = arith.constant 0 : index
    %c0_9 = arith.constant 0 : index
    %4 = vector.load %arg1[%c0_7, %c0_8, %c0_9] : memref<4x8x32xf32, #tpu.memory_space<vmem>>, vector<4x8x32xf32>
    %5 = vector.shape_cast %4 : vector<4x8x32xf32> to vector<32x32xf32>
    %cst = arith.constant dense<0.000000e+00> : vector<32x128xf32>
    %6 = tpu.matmul %5, %0, %cst {dimension_numbers = #tpu.dot_dimension_numbers<[1], [0], [0], [1], [0, 0, 1, 1], [], []>} : vector<32x32xf32>, vector<32x128xf32>, vector<32x128xf32> -> vector<32x128xf32>
    %7 = vector.shape_cast %6 : vector<32x128xf32> to vector<4x8x128xf32>
    %8 = vector.shape_cast %2 : vector<1x128xf32> to vector<1x1x128xf32>
    %9 = vector.broadcast %8 : vector<1x1x128xf32> to vector<4x8x128xf32>
    %10 = arith.addf %7, %9 : vector<4x8x128xf32>
    %cst_10 = arith.constant 0.000000e+00 : f32
    %11 = vector.broadcast %cst_10 : f32 to vector<4x32xf32>
    %cst_11 = arith.constant 0.000000e+00 : f32
    %12 = vector.broadcast %cst_11 : f32 to vector<4x32xf32>
    %13 = vector.extract_strided_slice %10 {offsets = [0, 0, 0], sizes = [4, 1, 128], strides = [1, 1, 1]} : vector<4x8x128xf32> to vector<4x1x128xf32>
    %14 = vector.shape_cast %13 : vector<4x1x128xf32> to vector<4x128xf32>
    %cst_12 = arith.constant dense<0.000000e+00> : vector<4x128xf32>
    %15 = tpu.matmul %11, %1, %cst_12 {dimension_numbers = #tpu.dot_dimension_numbers<[1], [0], [0], [1], [0, 0, 1, 1], [], []>} : vector<4x32xf32>, vector<32x128xf32>, vector<4x128xf32> -> vector<4x128xf32>
    %16 = arith.addf %14, %15 : vector<4x128xf32>
    %17 = vector.extract_strided_slice %16 {offsets = [0, 0], sizes = [4, 32], strides = [1, 1]} : vector<4x128xf32> to vector<4x32xf32>
    %18 = arith.negf %17 : vector<4x32xf32>
    %19 = math.exp %18 : vector<4x32xf32>
    %cst_13 = arith.constant 1.000000e+00 : f32
    %20 = vector.broadcast %cst_13 : f32 to vector<4x32xf32>
    %21 = arith.addf %20, %19 : vector<4x32xf32>
    %22 = arith.divf %20, %21 : vector<4x32xf32>
    %23 = vector.extract_strided_slice %16 {offsets = [0, 32], sizes = [4, 32], strides = [1, 1]} : vector<4x128xf32> to vector<4x32xf32>
    %24 = arith.negf %23 : vector<4x32xf32>
    %25 = math.exp %24 : vector<4x32xf32>
    %cst_14 = arith.constant 1.000000e+00 : f32
    %26 = vector.broadcast %cst_14 : f32 to vector<4x32xf32>
    %27 = arith.addf %26, %25 : vector<4x32xf32>
    %28 = arith.divf %26, %27 : vector<4x32xf32>
    %29 = vector.extract_strided_slice %16 {offsets = [0, 64], sizes = [4, 32], strides = [1, 1]} : vector<4x128xf32> to vector<4x32xf32>
    %30 = math.tanh %29 : vector<4x32xf32>
    %31 = vector.extract_strided_slice %16 {offsets = [0, 96], sizes = [4, 32], strides = [1, 1]} : vector<4x128xf32> to vector<4x32xf32>
    %32 = arith.negf %31 : vector<4x32xf32>
    %33 = math.exp %32 : vector<4x32xf32>
    %cst_15 = arith.constant 1.000000e+00 : f32
    %34 = vector.broadcast %cst_15 : f32 to vector<4x32xf32>
    %35 = arith.addf %34, %33 : vector<4x32xf32>
    %36 = arith.divf %34, %35 : vector<4x32xf32>
    %37 = arith.mulf %28, %12 : vector<4x32xf32>
    %38 = arith.mulf %22, %30 : vector<4x32xf32>
    %39 = arith.addf %37, %38 : vector<4x32xf32>
    %40 = math.tanh %39 : vector<4x32xf32>
    %41 = arith.mulf %36, %40 : vector<4x32xf32>
    %c0_i32 = arith.constant 0 : i32
    %42 = vector.broadcast %c0_i32 : i32 to vector<4x1xi32>
    %43 = arith.cmpi sgt, %3, %42 : vector<4x1xi32>
    %cst_16 = arith.constant 0.000000e+00 : f32
    %44 = vector.shape_cast %43 : vector<4x1xi1> to vector<4x1xi1>
    %45 = vector.broadcast %44 : vector<4x1xi1> to vector<4x32xi1>
    %46 = vector.broadcast %cst_16 : f32 to vector<4x32xf32>
    %47 = arith.select %45, %41, %46 : vector<4x32xi1>, vector<4x32xf32>
    %c0_17 = arith.constant 0 : index
    %c0_18 = arith.constant 0 : index
    %c0_19 = arith.constant 0 : index
    %48 = vector.load %arg6[%c0_17, %c0_18, %c0_19] : memref<4x8x32xf32, #tpu.memory_space<vmem>>, vector<4x1x32xf32>
    %49 = vector.shape_cast %48 : vector<4x1x32xf32> to vector<4x32xf32>
    %50 = vector.shape_cast %47 : vector<4x32xf32> to vector<4x1x32xf32>
    tpu.vector_store %arg6[%c0_17, %c0_18, %c0_19], %50 {strides = array<i32>} : memref<4x8x32xf32, #tpu.memory_space<vmem>>, vector<4x1x32xf32>,
    %51 = vector.extract_strided_slice %10 {offsets = [0, 1, 0], sizes = [4, 1, 128], strides = [1, 1, 1]} : vector<4x8x128xf32> to vector<4x1x128xf32>
    %52 = vector.shape_cast %51 : vector<4x1x128xf32> to vector<4x128xf32>
    %cst_20 = arith.constant dense<0.000000e+00> : vector<4x128xf32>
    %53 = tpu.matmul %41, %1, %cst_20 {dimension_numbers = #tpu.dot_dimension_numbers<[1], [0], [0], [1], [0, 0, 1, 1], [], []>} : vector<4x32xf32>, vector<32x128xf32>, vector<4x128xf32> -> vector<4x128xf32>
    %54 = arith.addf %52, %53 : vector<4x128xf32>
    %55 = vector.extract_strided_slice %54 {offsets = [0, 0], sizes = [4, 32], strides = [1, 1]} : vector<4x128xf32> to vector<4x32xf32>
    %56 = arith.negf %55 : vector<4x32xf32>
    %57 = math.exp %56 : vector<4x32xf32>
    %cst_21 = arith.constant 1.000000e+00 : f32
    %58 = vector.broadcast %cst_21 : f32 to vector<4x32xf32>
    %59 = arith.addf %58, %57 : vector<4x32xf32>
    %60 = arith.divf %58, %59 : vector<4x32xf32>
    %61 = vector.extract_strided_slice %54 {offsets = [0, 32], sizes = [4, 32], strides = [1, 1]} : vector<4x128xf32> to vector<4x32xf32>
    %62 = arith.negf %61 : vector<4x32xf32>
    %63 = math.exp %62 : vector<4x32xf32>
    %cst_22 = arith.constant 1.000000e+00 : f32
    %64 = vector.broadcast %cst_22 : f32 to vector<4x32xf32>
    %65 = arith.addf %64, %63 : vector<4x32xf32>
    %66 = arith.divf %64, %65 : vector<4x32xf32>
    %67 = vector.extract_strided_slice %54 {offsets = [0, 64], sizes = [4, 32], strides = [1, 1]} : vector<4x128xf32> to vector<4x32xf32>
    %68 = math.tanh %67 : vector<4x32xf32>
    %69 = vector.extract_strided_slice %54 {offsets = [0, 96], sizes = [4, 32], strides = [1, 1]} : vector<4x128xf32> to vector<4x32xf32>
    %70 = arith.negf %69 : vector<4x32xf32>
    %71 = math.exp %70 : vector<4x32xf32>
    %cst_23 = arith.constant 1.000000e+00 : f32
    %72 = vector.broadcast %cst_23 : f32 to vector<4x32xf32>
    %73 = arith.addf %72, %71 : vector<4x32xf32>
    %74 = arith.divf %72, %73 : vector<4x32xf32>
    %75 = arith.mulf %66, %39 : vector<4x32xf32>
    %76 = arith.mulf %60, %68 : vector<4x32xf32>
    %77 = arith.addf %75, %76 : vector<4x32xf32>
    %78 = math.tanh %77 : vector<4x32xf32>
    %79 = arith.mulf %74, %78 : vector<4x32xf32>
    %c1_i32 = arith.constant 1 : i32
    %80 = vector.broadcast %c1_i32 : i32 to vector<4x1xi32>
    %81 = arith.cmpi sgt, %3, %80 : vector<4x1xi32>
    %cst_24 = arith.constant 0.000000e+00 : f32
    %82 = vector.shape_cast %81 : vector<4x1xi1> to vector<4x1xi1>
    %83 = vector.broadcast %82 : vector<4x1xi1> to vector<4x32xi1>
    %84 = vector.broadcast %cst_24 : f32 to vector<4x32xf32>
    %85 = arith.select %83, %79, %84 : vector<4x32xi1>, vector<4x32xf32>
    %c0_25 = arith.constant 0 : index
    %c1 = arith.constant 1 : index
    %c0_26 = arith.constant 0 : index
    %86 = vector.load %arg6[%c0_25, %c1, %c0_26] : memref<4x8x32xf32, #tpu.memory_space<vmem>>, vector<4x1x32xf32>
    %87 = vector.shape_cast %86 : vector<4x1x32xf32> to vector<4x32xf32>
    %88 = vector.shape_cast %85 : vector<4x32xf32> to vector<4x1x32xf32>
    tpu.vector_store %arg6[%c0_25, %c1, %c0_26], %88 {strides = array<i32>} : memref<4x8x32xf32, #tpu.memory_space<vmem>>, vector<4x1x32xf32>,
    %89 = vector.extract_strided_slice %10 {offsets = [0, 2, 0], sizes = [4, 1, 128], strides = [1, 1, 1]} : vector<4x8x128xf32> to vector<4x1x128xf32>
    %90 = vector.shape_cast %89 : vector<4x1x128xf32> to vector<4x128xf32>
    %cst_27 = arith.constant dense<0.000000e+00> : vector<4x128xf32>
    %91 = tpu.matmul %79, %1, %cst_27 {dimension_numbers = #tpu.dot_dimension_numbers<[1], [0], [0], [1], [0, 0, 1, 1], [], []>} : vector<4x32xf32>, vector<32x128xf32>, vector<4x128xf32> -> vector<4x128xf32>
    %92 = arith.addf %90, %91 : vector<4x128xf32>
    %93 = vector.extract_strided_slice %92 {offsets = [0, 0], sizes = [4, 32], strides = [1, 1]} : vector<4x128xf32> to vector<4x32xf32>
    %94 = arith.negf %93 : vector<4x32xf32>
    %95 = math.exp %94 : vector<4x32xf32>
    %cst_28 = arith.constant 1.000000e+00 : f32
    %96 = vector.broadcast %cst_28 : f32 to vector<4x32xf32>
    %97 = arith.addf %96, %95 : vector<4x32xf32>
    %98 = arith.divf %96, %97 : vector<4x32xf32>
    %99 = vector.extract_strided_slice %92 {offsets = [0, 32], sizes = [4, 32], strides = [1, 1]} : vector<4x128xf32> to vector<4x32xf32>
    %100 = arith.negf %99 : vector<4x32xf32>
    %101 = math.exp %100 : vector<4x32xf32>
    %cst_29 = arith.constant 1.000000e+00 : f32
    %102 = vector.broadcast %cst_29 : f32 to vector<4x32xf32>
    %103 = arith.addf %102, %101 : vector<4x32xf32>
    %104 = arith.divf %102, %103 : vector<4x32xf32>
    %105 = vector.extract_strided_slice %92 {offsets = [0, 64], sizes = [4, 32], strides = [1, 1]} : vector<4x128xf32> to vector<4x32xf32>
    %106 = math.tanh %105 : vector<4x32xf32>
    %107 = vector.extract_strided_slice %92 {offsets = [0, 96], sizes = [4, 32], strides = [1, 1]} : vector<4x128xf32> to vector<4x32xf32>
    %108 = arith.negf %107 : vector<4x32xf32>
    %109 = math.exp %108 : vector<4x32xf32>
    %cst_30 = arith.constant 1.000000e+00 : f32
    %110 = vector.broadcast %cst_30 : f32 to vector<4x32xf32>
    %111 = arith.addf %110, %109 : vector<4x32xf32>
    %112 = arith.divf %110, %111 : vector<4x32xf32>
    %113 = arith.mulf %104, %77 : vector<4x32xf32>
    %114 = arith.mulf %98, %106 : vector<4x32xf32>
    %115 = arith.addf %113, %114 : vector<4x32xf32>
    %116 = math.tanh %115 : vector<4x32xf32>
    %117 = arith.mulf %112, %116 : vector<4x32xf32>
    %c2_i32 = arith.constant 2 : i32
    %118 = vector.broadcast %c2_i32 : i32 to vector<4x1xi32>
    %119 = arith.cmpi sgt, %3, %118 : vector<4x1xi32>
    %cst_31 = arith.constant 0.000000e+00 : f32
    %120 = vector.shape_cast %119 : vector<4x1xi1> to vector<4x1xi1>
    %121 = vector.broadcast %120 : vector<4x1xi1> to vector<4x32xi1>
    %122 = vector.broadcast %cst_31 : f32 to vector<4x32xf32>
    %123 = arith.select %121, %117, %122 : vector<4x32xi1>, vector<4x32xf32>
    %c0_32 = arith.constant 0 : index
    %c2 = arith.constant 2 : index
    %c0_33 = arith.constant 0 : index
    %124 = vector.load %arg6[%c0_32, %c2, %c0_33] : memref<4x8x32xf32, #tpu.memory_space<vmem>>, vector<4x1x32xf32>
    %125 = vector.shape_cast %124 : vector<4x1x32xf32> to vector<4x32xf32>
    %126 = vector.shape_cast %123 : vector<4x32xf32> to vector<4x1x32xf32>
    tpu.vector_store %arg6[%c0_32, %c2, %c0_33], %126 {strides = array<i32>} : memref<4x8x32xf32, #tpu.memory_space<vmem>>, vector<4x1x32xf32>,
    %127 = vector.extract_strided_slice %10 {offsets = [0, 3, 0], sizes = [4, 1, 128], strides = [1, 1, 1]} : vector<4x8x128xf32> to vector<4x1x128xf32>
    %128 = vector.shape_cast %127 : vector<4x1x128xf32> to vector<4x128xf32>
    %cst_34 = arith.constant dense<0.000000e+00> : vector<4x128xf32>
    %129 = tpu.matmul %117, %1, %cst_34 {dimension_numbers = #tpu.dot_dimension_numbers<[1], [0], [0], [1], [0, 0, 1, 1], [], []>} : vector<4x32xf32>, vector<32x128xf32>, vector<4x128xf32> -> vector<4x128xf32>
    %130 = arith.addf %128, %129 : vector<4x128xf32>
    %131 = vector.extract_strided_slice %130 {offsets = [0, 0], sizes = [4, 32], strides = [1, 1]} : vector<4x128xf32> to vector<4x32xf32>
    %132 = arith.negf %131 : vector<4x32xf32>
    %133 = math.exp %132 : vector<4x32xf32>
    %cst_35 = arith.constant 1.000000e+00 : f32
    %134 = vector.broadcast %cst_35 : f32 to vector<4x32xf32>
    %135 = arith.addf %134, %133 : vector<4x32xf32>
    %136 = arith.divf %134, %135 : vector<4x32xf32>
    %137 = vector.extract_strided_slice %130 {offsets = [0, 32], sizes = [4, 32], strides = [1, 1]} : vector<4x128xf32> to vector<4x32xf32>
    %138 = arith.negf %137 : vector<4x32xf32>
    %139 = math.exp %138 : vector<4x32xf32>
    %cst_36 = arith.constant 1.000000e+00 : f32
    %140 = vector.broadcast %cst_36 : f32 to vector<4x32xf32>
    %141 = arith.addf %140, %139 : vector<4x32xf32>
    %142 = arith.divf %140, %141 : vector<4x32xf32>
    %143 = vector.extract_strided_slice %130 {offsets = [0, 64], sizes = [4, 32], strides = [1, 1]} : vector<4x128xf32> to vector<4x32xf32>
    %144 = math.tanh %143 : vector<4x32xf32>
    %145 = vector.extract_strided_slice %130 {offsets = [0, 96], sizes = [4, 32], strides = [1, 1]} : vector<4x128xf32> to vector<4x32xf32>
    %146 = arith.negf %145 : vector<4x32xf32>
    %147 = math.exp %146 : vector<4x32xf32>
    %cst_37 = arith.constant 1.000000e+00 : f32
    %148 = vector.broadcast %cst_37 : f32 to vector<4x32xf32>
    %149 = arith.addf %148, %147 : vector<4x32xf32>
    %150 = arith.divf %148, %149 : vector<4x32xf32>
    %151 = arith.mulf %142, %115 : vector<4x32xf32>
    %152 = arith.mulf %136, %144 : vector<4x32xf32>
    %153 = arith.addf %151, %152 : vector<4x32xf32>
    %154 = math.tanh %153 : vector<4x32xf32>
    %155 = arith.mulf %150, %154 : vector<4x32xf32>
    %c3_i32 = arith.constant 3 : i32
    %156 = vector.broadcast %c3_i32 : i32 to vector<4x1xi32>
    %157 = arith.cmpi sgt, %3, %156 : vector<4x1xi32>
    %cst_38 = arith.constant 0.000000e+00 : f32
    %158 = vector.shape_cast %157 : vector<4x1xi1> to vector<4x1xi1>
    %159 = vector.broadcast %158 : vector<4x1xi1> to vector<4x32xi1>
    %160 = vector.broadcast %cst_38 : f32 to vector<4x32xf32>
    %161 = arith.select %159, %155, %160 : vector<4x32xi1>, vector<4x32xf32>
    %c0_39 = arith.constant 0 : index
    %c3 = arith.constant 3 : index
    %c0_40 = arith.constant 0 : index
    %162 = vector.load %arg6[%c0_39, %c3, %c0_40] : memref<4x8x32xf32, #tpu.memory_space<vmem>>, vector<4x1x32xf32>
    %163 = vector.shape_cast %162 : vector<4x1x32xf32> to vector<4x32xf32>
    %164 = vector.shape_cast %161 : vector<4x32xf32> to vector<4x1x32xf32>
    tpu.vector_store %arg6[%c0_39, %c3, %c0_40], %164 {strides = array<i32>} : memref<4x8x32xf32, #tpu.memory_space<vmem>>, vector<4x1x32xf32>,
    %165 = vector.extract_strided_slice %10 {offsets = [0, 4, 0], sizes = [4, 1, 128], strides = [1, 1, 1]} : vector<4x8x128xf32> to vector<4x1x128xf32>
    %166 = vector.shape_cast %165 : vector<4x1x128xf32> to vector<4x128xf32>
    %cst_41 = arith.constant dense<0.000000e+00> : vector<4x128xf32>
    %167 = tpu.matmul %155, %1, %cst_41 {dimension_numbers = #tpu.dot_dimension_numbers<[1], [0], [0], [1], [0, 0, 1, 1], [], []>} : vector<4x32xf32>, vector<32x128xf32>, vector<4x128xf32> -> vector<4x128xf32>
    %168 = arith.addf %166, %167 : vector<4x128xf32>
    %169 = vector.extract_strided_slice %168 {offsets = [0, 0], sizes = [4, 32], strides = [1, 1]} : vector<4x128xf32> to vector<4x32xf32>
    %170 = arith.negf %169 : vector<4x32xf32>
    %171 = math.exp %170 : vector<4x32xf32>
    %cst_42 = arith.constant 1.000000e+00 : f32
    %172 = vector.broadcast %cst_42 : f32 to vector<4x32xf32>
    %173 = arith.addf %172, %171 : vector<4x32xf32>
    %174 = arith.divf %172, %173 : vector<4x32xf32>
    %175 = vector.extract_strided_slice %168 {offsets = [0, 32], sizes = [4, 32], strides = [1, 1]} : vector<4x128xf32> to vector<4x32xf32>
    %176 = arith.negf %175 : vector<4x32xf32>
    %177 = math.exp %176 : vector<4x32xf32>
    %cst_43 = arith.constant 1.000000e+00 : f32
    %178 = vector.broadcast %cst_43 : f32 to vector<4x32xf32>
    %179 = arith.addf %178, %177 : vector<4x32xf32>
    %180 = arith.divf %178, %179 : vector<4x32xf32>
    %181 = vector.extract_strided_slice %168 {offsets = [0, 64], sizes = [4, 32], strides = [1, 1]} : vector<4x128xf32> to vector<4x32xf32>
    %182 = math.tanh %181 : vector<4x32xf32>
    %183 = vector.extract_strided_slice %168 {offsets = [0, 96], sizes = [4, 32], strides = [1, 1]} : vector<4x128xf32> to vector<4x32xf32>
    %184 = arith.negf %183 : vector<4x32xf32>
    %185 = math.exp %184 : vector<4x32xf32>
    %cst_44 = arith.constant 1.000000e+00 : f32
    %186 = vector.broadcast %cst_44 : f32 to vector<4x32xf32>
    %187 = arith.addf %186, %185 : vector<4x32xf32>
    %188 = arith.divf %186, %187 : vector<4x32xf32>
    %189 = arith.mulf %180, %153 : vector<4x32xf32>
    %190 = arith.mulf %174, %182 : vector<4x32xf32>
    %191 = arith.addf %189, %190 : vector<4x32xf32>
    %192 = math.tanh %191 : vector<4x32xf32>
    %193 = arith.mulf %188, %192 : vector<4x32xf32>
    %c4_i32 = arith.constant 4 : i32
    %194 = vector.broadcast %c4_i32 : i32 to vector<4x1xi32>
    %195 = arith.cmpi sgt, %3, %194 : vector<4x1xi32>
    %cst_45 = arith.constant 0.000000e+00 : f32
    %196 = vector.shape_cast %195 : vector<4x1xi1> to vector<4x1xi1>
    %197 = vector.broadcast %196 : vector<4x1xi1> to vector<4x32xi1>
    %198 = vector.broadcast %cst_45 : f32 to vector<4x32xf32>
    %199 = arith.select %197, %193, %198 : vector<4x32xi1>, vector<4x32xf32>
    %c0_46 = arith.constant 0 : index
    %c4 = arith.constant 4 : index
    %c0_47 = arith.constant 0 : index
    %200 = vector.load %arg6[%c0_46, %c4, %c0_47] : memref<4x8x32xf32, #tpu.memory_space<vmem>>, vector<4x1x32xf32>
    %201 = vector.shape_cast %200 : vector<4x1x32xf32> to vector<4x32xf32>
    %202 = vector.shape_cast %199 : vector<4x32xf32> to vector<4x1x32xf32>
    tpu.vector_store %arg6[%c0_46, %c4, %c0_47], %202 {strides = array<i32>} : memref<4x8x32xf32, #tpu.memory_space<vmem>>, vector<4x1x32xf32>,
    %203 = vector.extract_strided_slice %10 {offsets = [0, 5, 0], sizes = [4, 1, 128], strides = [1, 1, 1]} : vector<4x8x128xf32> to vector<4x1x128xf32>
    %204 = vector.shape_cast %203 : vector<4x1x128xf32> to vector<4x128xf32>
    %cst_48 = arith.constant dense<0.000000e+00> : vector<4x128xf32>
    %205 = tpu.matmul %193, %1, %cst_48 {dimension_numbers = #tpu.dot_dimension_numbers<[1], [0], [0], [1], [0, 0, 1, 1], [], []>} : vector<4x32xf32>, vector<32x128xf32>, vector<4x128xf32> -> vector<4x128xf32>
    %206 = arith.addf %204, %205 : vector<4x128xf32>
    %207 = vector.extract_strided_slice %206 {offsets = [0, 0], sizes = [4, 32], strides = [1, 1]} : vector<4x128xf32> to vector<4x32xf32>
    %208 = arith.negf %207 : vector<4x32xf32>
    %209 = math.exp %208 : vector<4x32xf32>
    %cst_49 = arith.constant 1.000000e+00 : f32
    %210 = vector.broadcast %cst_49 : f32 to vector<4x32xf32>
    %211 = arith.addf %210, %209 : vector<4x32xf32>
    %212 = arith.divf %210, %211 : vector<4x32xf32>
    %213 = vector.extract_strided_slice %206 {offsets = [0, 32], sizes = [4, 32], strides = [1, 1]} : vector<4x128xf32> to vector<4x32xf32>
    %214 = arith.negf %213 : vector<4x32xf32>
    %215 = math.exp %214 : vector<4x32xf32>
    %cst_50 = arith.constant 1.000000e+00 : f32
    %216 = vector.broadcast %cst_50 : f32 to vector<4x32xf32>
    %217 = arith.addf %216, %215 : vector<4x32xf32>
    %218 = arith.divf %216, %217 : vector<4x32xf32>
    %219 = vector.extract_strided_slice %206 {offsets = [0, 64], sizes = [4, 32], strides = [1, 1]} : vector<4x128xf32> to vector<4x32xf32>
    %220 = math.tanh %219 : vector<4x32xf32>
    %221 = vector.extract_strided_slice %206 {offsets = [0, 96], sizes = [4, 32], strides = [1, 1]} : vector<4x128xf32> to vector<4x32xf32>
    %222 = arith.negf %221 : vector<4x32xf32>
    %223 = math.exp %222 : vector<4x32xf32>
    %cst_51 = arith.constant 1.000000e+00 : f32
    %224 = vector.broadcast %cst_51 : f32 to vector<4x32xf32>
    %225 = arith.addf %224, %223 : vector<4x32xf32>
    %226 = arith.divf %224, %225 : vector<4x32xf32>
    %227 = arith.mulf %218, %191 : vector<4x32xf32>
    %228 = arith.mulf %212, %220 : vector<4x32xf32>
    %229 = arith.addf %227, %228 : vector<4x32xf32>
    %230 = math.tanh %229 : vector<4x32xf32>
    %231 = arith.mulf %226, %230 : vector<4x32xf32>
    %c5_i32 = arith.constant 5 : i32
    %232 = vector.broadcast %c5_i32 : i32 to vector<4x1xi32>
    %233 = arith.cmpi sgt, %3, %232 : vector<4x1xi32>
    %cst_52 = arith.constant 0.000000e+00 : f32
    %234 = vector.shape_cast %233 : vector<4x1xi1> to vector<4x1xi1>
    %235 = vector.broadcast %234 : vector<4x1xi1> to vector<4x32xi1>
    %236 = vector.broadcast %cst_52 : f32 to vector<4x32xf32>
    %237 = arith.select %235, %231, %236 : vector<4x32xi1>, vector<4x32xf32>
    %c0_53 = arith.constant 0 : index
    %c5 = arith.constant 5 : index
    %c0_54 = arith.constant 0 : index
    %238 = vector.load %arg6[%c0_53, %c5, %c0_54] : memref<4x8x32xf32, #tpu.memory_space<vmem>>, vector<4x1x32xf32>
    %239 = vector.shape_cast %238 : vector<4x1x32xf32> to vector<4x32xf32>
    %240 = vector.shape_cast %237 : vector<4x32xf32> to vector<4x1x32xf32>
    tpu.vector_store %arg6[%c0_53, %c5, %c0_54], %240 {strides = array<i32>} : memref<4x8x32xf32, #tpu.memory_space<vmem>>, vector<4x1x32xf32>,
    %241 = vector.extract_strided_slice %10 {offsets = [0, 6, 0], sizes = [4, 1, 128], strides = [1, 1, 1]} : vector<4x8x128xf32> to vector<4x1x128xf32>
    %242 = vector.shape_cast %241 : vector<4x1x128xf32> to vector<4x128xf32>
    %cst_55 = arith.constant dense<0.000000e+00> : vector<4x128xf32>
    %243 = tpu.matmul %231, %1, %cst_55 {dimension_numbers = #tpu.dot_dimension_numbers<[1], [0], [0], [1], [0, 0, 1, 1], [], []>} : vector<4x32xf32>, vector<32x128xf32>, vector<4x128xf32> -> vector<4x128xf32>
    %244 = arith.addf %242, %243 : vector<4x128xf32>
    %245 = vector.extract_strided_slice %244 {offsets = [0, 0], sizes = [4, 32], strides = [1, 1]} : vector<4x128xf32> to vector<4x32xf32>
    %246 = arith.negf %245 : vector<4x32xf32>
    %247 = math.exp %246 : vector<4x32xf32>
    %cst_56 = arith.constant 1.000000e+00 : f32
    %248 = vector.broadcast %cst_56 : f32 to vector<4x32xf32>
    %249 = arith.addf %248, %247 : vector<4x32xf32>
    %250 = arith.divf %248, %249 : vector<4x32xf32>
    %251 = vector.extract_strided_slice %244 {offsets = [0, 32], sizes = [4, 32], strides = [1, 1]} : vector<4x128xf32> to vector<4x32xf32>
    %252 = arith.negf %251 : vector<4x32xf32>
    %253 = math.exp %252 : vector<4x32xf32>
    %cst_57 = arith.constant 1.000000e+00 : f32
    %254 = vector.broadcast %cst_57 : f32 to vector<4x32xf32>
    %255 = arith.addf %254, %253 : vector<4x32xf32>
    %256 = arith.divf %254, %255 : vector<4x32xf32>
    %257 = vector.extract_strided_slice %244 {offsets = [0, 64], sizes = [4, 32], strides = [1, 1]} : vector<4x128xf32> to vector<4x32xf32>
    %258 = math.tanh %257 : vector<4x32xf32>
    %259 = vector.extract_strided_slice %244 {offsets = [0, 96], sizes = [4, 32], strides = [1, 1]} : vector<4x128xf32> to vector<4x32xf32>
    %260 = arith.negf %259 : vector<4x32xf32>
    %261 = math.exp %260 : vector<4x32xf32>
    %cst_58 = arith.constant 1.000000e+00 : f32
    %262 = vector.broadcast %cst_58 : f32 to vector<4x32xf32>
    %263 = arith.addf %262, %261 : vector<4x32xf32>
    %264 = arith.divf %262, %263 : vector<4x32xf32>
    %265 = arith.mulf %256, %229 : vector<4x32xf32>
    %266 = arith.mulf %250, %258 : vector<4x32xf32>
    %267 = arith.addf %265, %266 : vector<4x32xf32>
    %268 = math.tanh %267 : vector<4x32xf32>
    %269 = arith.mulf %264, %268 : vector<4x32xf32>
    %c6_i32 = arith.constant 6 : i32
    %270 = vector.broadcast %c6_i32 : i32 to vector<4x1xi32>
    %271 = arith.cmpi sgt, %3, %270 : vector<4x1xi32>
    %cst_59 = arith.constant 0.000000e+00 : f32
    %272 = vector.shape_cast %271 : vector<4x1xi1> to vector<4x1xi1>
    %273 = vector.broadcast %272 : vector<4x1xi1> to vector<4x32xi1>
    %274 = vector.broadcast %cst_59 : f32 to vector<4x32xf32>
    %275 = arith.select %273, %269, %274 : vector<4x32xi1>, vector<4x32xf32>
    %c0_60 = arith.constant 0 : index
    %c6 = arith.constant 6 : index
    %c0_61 = arith.constant 0 : index
    %276 = vector.load %arg6[%c0_60, %c6, %c0_61] : memref<4x8x32xf32, #tpu.memory_space<vmem>>, vector<4x1x32xf32>
    %277 = vector.shape_cast %276 : vector<4x1x32xf32> to vector<4x32xf32>
    %278 = vector.shape_cast %275 : vector<4x32xf32> to vector<4x1x32xf32>
    tpu.vector_store %arg6[%c0_60, %c6, %c0_61], %278 {strides = array<i32>} : memref<4x8x32xf32, #tpu.memory_space<vmem>>, vector<4x1x32xf32>,
    %279 = vector.extract_strided_slice %10 {offsets = [0, 7, 0], sizes = [4, 1, 128], strides = [1, 1, 1]} : vector<4x8x128xf32> to vector<4x1x128xf32>
    %280 = vector.shape_cast %279 : vector<4x1x128xf32> to vector<4x128xf32>
    %cst_62 = arith.constant dense<0.000000e+00> : vector<4x128xf32>
    %281 = tpu.matmul %269, %1, %cst_62 {dimension_numbers = #tpu.dot_dimension_numbers<[1], [0], [0], [1], [0, 0, 1, 1], [], []>} : vector<4x32xf32>, vector<32x128xf32>, vector<4x128xf32> -> vector<4x128xf32>
    %282 = arith.addf %280, %281 : vector<4x128xf32>
    %283 = vector.extract_strided_slice %282 {offsets = [0, 0], sizes = [4, 32], strides = [1, 1]} : vector<4x128xf32> to vector<4x32xf32>
    %284 = arith.negf %283 : vector<4x32xf32>
    %285 = math.exp %284 : vector<4x32xf32>
    %cst_63 = arith.constant 1.000000e+00 : f32
    %286 = vector.broadcast %cst_63 : f32 to vector<4x32xf32>
    %287 = arith.addf %286, %285 : vector<4x32xf32>
    %288 = arith.divf %286, %287 : vector<4x32xf32>
    %289 = vector.extract_strided_slice %282 {offsets = [0, 32], sizes = [4, 32], strides = [1, 1]} : vector<4x128xf32> to vector<4x32xf32>
    %290 = arith.negf %289 : vector<4x32xf32>
    %291 = math.exp %290 : vector<4x32xf32>
    %cst_64 = arith.constant 1.000000e+00 : f32
    %292 = vector.broadcast %cst_64 : f32 to vector<4x32xf32>
    %293 = arith.addf %292, %291 : vector<4x32xf32>
    %294 = arith.divf %292, %293 : vector<4x32xf32>
    %295 = vector.extract_strided_slice %282 {offsets = [0, 64], sizes = [4, 32], strides = [1, 1]} : vector<4x128xf32> to vector<4x32xf32>
    %296 = math.tanh %295 : vector<4x32xf32>
    %297 = vector.extract_strided_slice %282 {offsets = [0, 96], sizes = [4, 32], strides = [1, 1]} : vector<4x128xf32> to vector<4x32xf32>
    %298 = arith.negf %297 : vector<4x32xf32>
    %299 = math.exp %298 : vector<4x32xf32>
    %cst_65 = arith.constant 1.000000e+00 : f32
    %300 = vector.broadcast %cst_65 : f32 to vector<4x32xf32>
    %301 = arith.addf %300, %299 : vector<4x32xf32>
    %302 = arith.divf %300, %301 : vector<4x32xf32>
    %303 = arith.mulf %294, %267 : vector<4x32xf32>
    %304 = arith.mulf %288, %296 : vector<4x32xf32>
    %305 = arith.addf %303, %304 : vector<4x32xf32>
    %306 = math.tanh %305 : vector<4x32xf32>
    %307 = arith.mulf %302, %306 : vector<4x32xf32>
    %c7_i32 = arith.constant 7 : i32
    %308 = vector.broadcast %c7_i32 : i32 to vector<4x1xi32>
    %309 = arith.cmpi sgt, %3, %308 : vector<4x1xi32>
    %cst_66 = arith.constant 0.000000e+00 : f32
    %310 = vector.shape_cast %309 : vector<4x1xi1> to vector<4x1xi1>
    %311 = vector.broadcast %310 : vector<4x1xi1> to vector<4x32xi1>
    %312 = vector.broadcast %cst_66 : f32 to vector<4x32xf32>
    %313 = arith.select %311, %307, %312 : vector<4x32xi1>, vector<4x32xf32>
    %c0_67 = arith.constant 0 : index
    %c7 = arith.constant 7 : index
    %c0_68 = arith.constant 0 : index
    %314 = vector.load %arg6[%c0_67, %c7, %c0_68] : memref<4x8x32xf32, #tpu.memory_space<vmem>>, vector<4x1x32xf32>
    %315 = vector.shape_cast %314 : vector<4x1x32xf32> to vector<4x32xf32>
    %316 = vector.shape_cast %313 : vector<4x32xf32> to vector<4x1x32xf32>
    tpu.vector_store %arg6[%c0_67, %c7, %c0_68], %316 {strides = array<i32>} : memref<4x8x32xf32, #tpu.memory_space<vmem>>, vector<4x1x32xf32>,
    return
  }
  func.func @transform_0(%arg0: i32) -> (i32, i32, i32) {
    %c0_i32 = arith.constant 0 : i32
    %c0_i32_0 = arith.constant 0 : i32
    %c0_i32_1 = arith.constant 0 : i32
    return %arg0, %c0_i32, %c0_i32_0 : i32, i32, i32
  }
  func.func @transform_1(%arg0: i32) -> (i32, i32) {
    %c0_i32 = arith.constant 0 : i32
    %c0_i32_0 = arith.constant 0 : i32
    %c0_i32_1 = arith.constant 0 : i32
    return %c0_i32, %c0_i32_0 : i32, i32
  }
  func.func @transform_2(%arg0: i32) -> (i32, i32) {
    %c0_i32 = arith.constant 0 : i32
    %c0_i32_0 = arith.constant 0 : i32
    %c0_i32_1 = arith.constant 0 : i32
    return %c0_i32, %c0_i32_0 : i32, i32
  }
  func.func @transform_3(%arg0: i32) -> (i32, i32) {
    %c0_i32 = arith.constant 0 : i32
    %c0_i32_0 = arith.constant 0 : i32
    %c0_i32_1 = arith.constant 0 : i32
    return %c0_i32, %c0_i32_0 : i32, i32
  }
  func.func @transform_4(%arg0: i32) -> (i32, i32) {
    %c0_i32 = arith.constant 0 : i32
    %c0_i32_0 = arith.constant 0 : i32
    return %arg0, %c0_i32 : i32, i32
  }
  func.func @transform_5(%arg0: i32) -> (i32, i32, i32) {
    %c0_i32 = arith.constant 0 : i32
    %c0_i32_0 = arith.constant 0 : i32
    %c0_i32_1 = arith.constant 0 : i32
    return %arg0, %c0_i32, %c0_i32_0 : i32, i32, i32
  }
}

</mosaic_0001>

<llo_original>
// kernel: tpu_custom_call.1
$region0: #{tpu_custom_call.1}
  #allocation0 [shape = 'u32[]', space=smem, size = 0x4, offset = 0x4, fixed_abs, tag = 'smem constant byte address 0x4 - core index']
  #allocation1 [shape = 'u32[72,128]{1,0:T(1,128)}', space=vmem, size = 0x9000, scoped, tag = 'internal scratch']
  %s0 = inlined_call_operand.hbm [shape: f32[4,8,32], index: 0, kind: input, shape index: {}]
  %s1 = inlined_call_operand.hbm [shape: f32[32,128], index: 1, kind: input, shape index: {}]
  %s2 = inlined_call_operand.hbm [shape: f32[32,128], index: 2, kind: input, shape index: {}]
  %s3 = inlined_call_operand.vmem [shape: f32[1,128], index: 3, kind: input, shape index: {}]
  %s4 = inlined_call_operand.vmem [shape: s32[4,1], index: 4, kind: input, shape index: {}]
  %s5 = inlined_call_operand.hbm [shape: f32[4,8,32], index: 5, kind: output, shape index: {}]
  %s6 = sld [smem:[#allocation0]]
  $region42: #{tpu_custom_call.1} parent=0
    _
  %s8 = ssub.s32 1, %s6
  %s9 = scalar_select 0, %s8, %s6
  $region1: #{tpu_custom_call.1} parent=0
    #allocation2 [shape = 'u8[16384]{0}', space=vmem, size = 0x4000, scoped, tag = 'input window, operand 0, single buffered']
    #allocation3 [shape = 's32[1]{0}', space=sflag, size = 0x4, scoped, tag = 'scoped memory for tpu_custom_call.1']
    #allocation4 [shape = 's32[1]{0}', space=sflag, size = 0x4, scoped, tag = 'scoped memory for tpu_custom_call.1']
    #allocation5 [shape = 'u8[16384]{0}', space=vmem, size = 0x4000, scoped, tag = 'input window, operand 1, single buffered']
    #allocation6 [shape = 's32[1]{0}', space=sflag, size = 0x4, scoped, tag = 'scoped memory for tpu_custom_call.1']
    #allocation7 [shape = 'u8[16384]{0}', space=vmem, size = 0x4000, scoped, tag = 'input window, operand 2, single buffered']
    #allocation8 [shape = 'u8[16384]{0}', space=vmem, size = 0x4000, scoped, tag = 'output window, operand 0, single buffered']
    %10 = vsyncpa [#allocation3], 0
    %11 = vsyncpa [#allocation6], 0
    %12 = vsyncpa [#allocation4], 0
    // Predicated region
    $region2: #{tpu_custom_call.1} parent=1 // pred_check
      _
    $region3: #{tpu_custom_call.1} parent=1 // pred_check_branch
      %14 = sbr.rel (0) target = $region5
    $region4: #{tpu_custom_call.1} parent=1 // pred_region
      %16 = vsyncadd [#allocation3], 0
      %s17 = sshll.u32 %s0, 4
      %s18 = int_to_ptr.hbm [resolvable:$true] %s17
      %s19 = sshll.u32 [#allocation2], 4
      %s20 = int_to_ptr.vmem [resolvable:$true] %s19
      %25 = dma.hbm_to_vmem [thread:$0]  %s18, 512, %s20, [#allocation3], 128, 128, 8
    $region5: #{tpu_custom_call.1} parent=1 // pred_fallthru
      _
    // Predicated region
    $region6: #{tpu_custom_call.1} parent=1 // pred_check
      _
    $region7: #{tpu_custom_call.1} parent=1 // pred_check_branch
      %27 = sbr.rel (0) target = $region9
    $region8: #{tpu_custom_call.1} parent=1 // pred_region
      %29 = vsyncadd [#allocation6], 0
      %s30 = sshll.u32 %s1, 4
      %s31 = int_to_ptr.hbm [resolvable:$true] %s30
      %s32 = sshll.u32 [#allocation5], 4
      %s33 = int_to_ptr.vmem [resolvable:$true] %s32
      %38 = dma.hbm_to_vmem [thread:$0]  %s31, 512, %s33, [#allocation6], 128, 128, 8
    $region9: #{tpu_custom_call.1} parent=1 // pred_fallthru
      _
    // Predicated region
    $region10: #{tpu_custom_call.1} parent=1 // pred_check
      _
    $region11: #{tpu_custom_call.1} parent=1 // pred_check_branch
      %40 = sbr.rel (0) target = $region13
    $region12: #{tpu_custom_call.1} parent=1 // pred_region
      %42 = vsyncadd [#allocation6], 0
      %s43 = sshll.u32 %s2, 4
      %s44 = int_to_ptr.hbm [resolvable:$true] %s43
      %s45 = sshll.u32 [#allocation7], 4
      %s46 = int_to_ptr.vmem [resolvable:$true] %s45
      %51 = dma.hbm_to_vmem [thread:$0]  %s44, 512, %s46, [#allocation6], 128, 128, 8
    $region13: #{tpu_custom_call.1} parent=1 // pred_fallthru
      _
    // Predicated region
    $region14: #{tpu_custom_call.1} parent=1 // pred_check
      _
    $region15: #{tpu_custom_call.1} parent=1 // pred_check_branch
      %53 = sbr.rel (0) target = $region17
    $region16: #{tpu_custom_call.1} parent=1 // pred_region
      _
    $region17: #{tpu_custom_call.1} parent=1 // pred_fallthru
      _
    // Predicated region
    $region18: #{tpu_custom_call.1} parent=1 // pred_check
      _
    $region19: #{tpu_custom_call.1} parent=1 // pred_check_branch
      %55 = sbr.rel (0) target = $region21
    $region20: #{tpu_custom_call.1} parent=1 // pred_region
      _
    $region21: #{tpu_custom_call.1} parent=1 // pred_fallthru
      _
    // Predicated region
    $region22: #{tpu_custom_call.1} parent=1 // pred_check
      _
    $region23: #{tpu_custom_call.1} parent=1 // pred_check_branch
      %57 = sbr.rel (0) target = $region25
    $region24: #{tpu_custom_call.1} parent=1 // pred_region
      %59 = dma.done [#allocation3], 512
    $region25: #{tpu_custom_call.1} parent=1 // pred_fallthru
      _
    // Predicated region
    $region26: #{tpu_custom_call.1} parent=1 // pred_check
      _
    $region27: #{tpu_custom_call.1} parent=1 // pred_check_branch
      %61 = sbr.rel (0) target = $region29
    $region28: #{tpu_custom_call.1} parent=1 // pred_region
      %63 = dma.done [#allocation6], 512
    $region29: #{tpu_custom_call.1} parent=1 // pred_fallthru
      _
    // Predicated region
    $region30: #{tpu_custom_call.1} parent=1 // pred_check
      _
    $region31: #{tpu_custom_call.1} parent=1 // pred_check_branch
      %65 = sbr.rel (0) target = $region33
    $region32: #{tpu_custom_call.1} parent=1 // pred_region
      %67 = dma.done [#allocation6], 512
    $region33: #{tpu_custom_call.1} parent=1 // pred_fallthru
      _
    %v68 = vld [vmem:[#allocation5] sm:$0xff]
    %v69 = vld [vmem:[#allocation5 + $0x8] sm:$0xff]
    %v70 = vld [vmem:[#allocation5 + $0x10] sm:$0xff]
    %v71 = vld [vmem:[#allocation5 + $0x18] sm:$0xff]
    %v72 = vld [vmem:[#allocation7] sm:$0xff]
    %v73 = vld [vmem:[#allocation7 + $0x8] sm:$0xff]
    %v74 = vld [vmem:[#allocation7 + $0x10] sm:$0xff]
    %v75 = vld [vmem:[#allocation7 + $0x18] sm:$0xff]
    %v76 = vld [vmem:[%s3] sm:$0x1]
    %v77 = vld [vmem:[%s4] sm:$0xf]
    %v78 = vld [vmem:[#allocation2] sm:$0xff]
    %v79 = vld [vmem:[#allocation2 + $0x8] sm:$0xff]
    %v80 = vld [vmem:[#allocation2 + $0x10] sm:$0xff]
    %v81 = vld [vmem:[#allocation2 + $0x18] sm:$0xff]
    %vm82 = vcmask 261120
    %v84 = vsel %vm82, %v78, 0
    %v87 = vsel %vm82, %v79, 0
    %v90 = vsel %vm82, %v80, 0
    %v93 = vsel %vm82, %v81, 0
    %95 = vmatpush.msra.mxu0 0.0
    %96 = vmatpush.msra.mxu0 0.0
    %97 = vmatpush.msra.mxu0 0.0
    %98 = vmatpush.msra.mxu0 0.0
    %99 = vmatpush.msra.mxu0 0.0
    %100 = vmatpush.msra.mxu0 0.0
    %101 = vmatpush.msra.mxu0 0.0
    %102 = vmatpush.msra.mxu0 0.0
    %103 = vmatpush.msra.mxu0 0.0
    %104 = vmatpush.msra.mxu0 0.0
    %105 = vmatpush.msra.mxu0 0.0
    %106 = vmatpush.msra.mxu0 0.0
    %107 = vmatpush.msra.mxu0 %v71
    %108 = vmatpush.msra.mxu0 %v70
    %109 = vmatpush.msra.mxu0 %v69
    %110 = vmatpush.msra.mxu0 %v68
    %111 = vmatmul.f32.gmra.mxu0 %v84
    %v112 = vpop.f32.mrf.mxu0
    %v113 = vadd.f32 0.0, %v112
    %114 = vmatmul.f32.gmra.mxu0 %v87
    %v115 = vpop.f32.mrf.mxu0
    %v116 = vadd.f32 0.0, %v115
    %117 = vmatmul.f32.gmra.mxu0 %v90
    %v118 = vpop.f32.mrf.mxu0
    %v119 = vadd.f32 0.0, %v118
    %120 = vmatmul.f32.gmra.mxu0 %v93
    %v121 = vpop.f32.mrf.mxu0
    %v122 = vadd.f32 0.0, %v121
    %123 = vdwg.mxu0
    %v125 = vperm.slane %v76, 0
    %v127 = vadd.f32 %v113, %v125
    %v128 = vadd.f32 %v116, %v125
    %v129 = vadd.f32 %v119, %v125
    %v130 = vadd.f32 %v122, %v125
    %v132 = vsel %vm82, 0.0, 0
    %134 = vmatpush.msra.mxu0 0.0
    %135 = vmatpush.msra.mxu0 0.0
    %136 = vmatpush.msra.mxu0 0.0
    %137 = vmatpush.msra.mxu0 0.0
    %138 = vmatpush.msra.mxu0 0.0
    %139 = vmatpush.msra.mxu0 0.0
    %140 = vmatpush.msra.mxu0 0.0
    %141 = vmatpush.msra.mxu0 0.0
    %142 = vmatpush.msra.mxu0 0.0
    %143 = vmatpush.msra.mxu0 0.0
    %144 = vmatpush.msra.mxu0 0.0
    %145 = vmatpush.msra.mxu0 0.0
    %146 = vmatpush.msra.mxu0 %v75
    %147 = vmatpush.msra.mxu0 %v74
    %148 = vmatpush.msra.mxu0 %v73
    %149 = vmatpush.msra.mxu0 %v72
    %150 = vmatmul.f32.gmra.mxu0 %v132
    %v151 = vpop.f32.mrf.mxu0
    %v152 = vadd.f32 0.0, %v151
    %153 = vdwg.mxu0
    %v155 = vrot.slane %v152, 1
    %v156 = vrot.slane %v152, 2
    %v157 = vrot.slane %v152, 3
    %v162 = vadd.f32 %v127, %v152
    %v163 = vadd.f32 %v128, %v155
    %v164 = vadd.f32 %v129, %v156
    %v165 = vadd.f32 %v130, %v157
    %v166 = vxor.u32 %v162, 2147483648
    %v167 = vxor.u32 %v163, 2147483648
    %v168 = vxor.u32 %v164, 2147483648
    %v169 = vxor.u32 %v165, 2147483648
    %v170 = vmul.f32 %v166, 1.442695
    %v171 = vpow.pop %v170
    %v172 = vmul.f32 %v167, 1.442695
    %v173 = vpow.pop %v172
    %v174 = vmul.f32 %v168, 1.442695
    %v175 = vpow.pop %v174
    %v176 = vmul.f32 %v169, 1.442695
    %v177 = vpow.pop %v176
    %v178 = vadd.f32 %v171, 1.0
    %v179 = vadd.f32 %v173, 1.0
    %v180 = vadd.f32 %v175, 1.0
    %v181 = vadd.f32 %v177, 1.0
    %v182 = vrcp.pop %v178
    %v183 = vmul.f32 %v178, %v182
    %v184 = vsub.f32 1.0, %v183
    %v185 = vmul.f32 %v182, %v184
    %v186 = vadd.f32 %v182, %v185
    %vm187 = vweird.f32 %v178
    %vm188 = vweird.f32 %v182
    %vm189 = vmor %vm187, %vm188
    %v190 = vsel %vm189, %v182, %v186
    %v191 = vand.u32 2147483647, %v178
    %vm192 = vcmp.eq.f32.partialorder %v191, 8.507059e+37
    %v193 = vand.u32 %v178, 2147483648
    %v194 = vor.u32 1.1754944e-38, %v193
    %v195 = vsel %vm192, %v194, %v190
    %v196 = vmul.f32 1.0, %v195
    %v197 = vrcp.pop %v179
    %v198 = vmul.f32 %v179, %v197
    %v199 = vsub.f32 1.0, %v198
    %v200 = vmul.f32 %v197, %v199
    %v201 = vadd.f32 %v197, %v200
    %vm202 = vweird.f32 %v179
    %vm203 = vweird.f32 %v197
    %vm204 = vmor %vm202, %vm203
    %v205 = vsel %vm204, %v197, %v201
    %v206 = vand.u32 2147483647, %v179
    %vm207 = vcmp.eq.f32.partialorder %v206, 8.507059e+37
    %v208 = vand.u32 %v179, 2147483648
    %v209 = vor.u32 1.1754944e-38, %v208
    %v210 = vsel %vm207, %v209, %v205
    %v211 = vmul.f32 1.0, %v210
    %v212 = vrcp.pop %v180
    %v213 = vmul.f32 %v180, %v212
    %v214 = vsub.f32 1.0, %v213
    %v215 = vmul.f32 %v212, %v214
    %v216 = vadd.f32 %v212, %v215
    %vm217 = vweird.f32 %v180
    %vm218 = vweird.f32 %v212
    %vm219 = vmor %vm217, %vm218
    %v220 = vsel %vm219, %v212, %v216
    %v221 = vand.u32 2147483647, %v180
    %vm222 = vcmp.eq.f32.partialorder %v221, 8.507059e+37
    %v223 = vand.u32 %v180, 2147483648
    %v224 = vor.u32 1.1754944e-38, %v223
    %v225 = vsel %vm222, %v224, %v220
    %v226 = vmul.f32 1.0, %v225
    %v227 = vrcp.pop %v181
    %v228 = vmul.f32 %v181, %v227
    %v229 = vsub.f32 1.0, %v228
    %v230 = vmul.f32 %v227, %v229
    %v231 = vadd.f32 %v227, %v230
    %vm232 = vweird.f32 %v181
    %vm233 = vweird.f32 %v227
    %vm234 = vmor %vm232, %vm233
    %v235 = vsel %vm234, %v227, %v231
    %v236 = vand.u32 2147483647, %v181
    %vm237 = vcmp.eq.f32.partialorder %v236, 8.507059e+37
    %v238 = vand.u32 %v181, 2147483648
    %v239 = vor.u32 1.1754944e-38, %v238
    %v240 = vsel %vm237, %v239, %v235
    %v241 = vmul.f32 1.0, %v240
    %v242 = vtanh.pop %v162
    %v243 = vtanh.pop %v163
    %v244 = vtanh.pop %v164
    %v245 = vtanh.pop %v165
    %v246 = vmul.f32 %v196, 0.0
    %v247 = vmul.f32 %v211, 0.0
    %v248 = vmul.f32 %v226, 0.0
    %v249 = vmul.f32 %v241, 0.0
    %254 = vrot.lane.b32.xlu0 %v242, 64
    %v255 = vpop.permute.xlu0 %254
    %256 = vrot.lane.b32.xlu0 %v243, 64
    %v257 = vpop.permute.xlu0 %256
    %258 = vrot.lane.b32.xlu0 %v244, 64
    %v259 = vpop.permute.xlu0 %258
    %260 = vrot.lane.b32.xlu0 %v245, 64
    %v261 = vpop.permute.xlu0 %260
    %v266 = vmul.f32 %v196, %v255
    %v267 = vmul.f32 %v211, %v257
    %v268 = vmul.f32 %v226, %v259
    %v269 = vmul.f32 %v241, %v261
    %274 = vrot.lane.b32.xlu0 %v266, 32
    %v275 = vpop.permute.xlu0 %274
    %276 = vrot.lane.b32.xlu0 %v267, 32
    %v277 = vpop.permute.xlu0 %276
    %278 = vrot.lane.b32.xlu0 %v268, 32
    %v279 = vpop.permute.xlu0 %278
    %280 = vrot.lane.b32.xlu0 %v269, 32
    %v281 = vpop.permute.xlu0 %280
    %v286 = vadd.f32 %v246, %v275
    %v287 = vadd.f32 %v247, %v277
    %v288 = vadd.f32 %v248, %v279
    %v289 = vadd.f32 %v249, %v281
    %v290 = vtanh.pop %v286
    %v291 = vtanh.pop %v287
    %v292 = vtanh.pop %v288
    %v293 = vtanh.pop %v289
    %298 = vrot.lane.b32.xlu0 %v290, 64
    %v299 = vpop.permute.xlu0 %298
    %300 = vrot.lane.b32.xlu0 %v291, 64
    %v301 = vpop.permute.xlu0 %300
    %302 = vrot.lane.b32.xlu0 %v292, 64
    %v303 = vpop.permute.xlu0 %302
    %304 = vrot.lane.b32.xlu0 %v293, 64
    %v305 = vpop.permute.xlu0 %304
    %v310 = vmul.f32 %v196, %v299
    %v311 = vmul.f32 %v211, %v301
    %v312 = vmul.f32 %v226, %v303
    %v313 = vmul.f32 %v241, %v305
    %vm314 = vcmp.gt.s32.totalorder %v77, 0
    %v315 = vsel %vm314, 1, 0
    %316 = vset.pattern.permute.xlu0 0
    %317 = vperm.xlu0 %316, %v315
    %v318 = vpop.permute.xlu0 %317
    %vm319 = vcmp.eq.s32.totalorder %v318, 1
    %v324 = vrot.slane %v311, 7
    %vm325 = vcmask 1041409
    %v326 = vsel %vm325, %v324, %v310
    %v327 = vrot.slane %v312, 6
    %vm328 = vcmask 1042434
    %v329 = vsel %vm328, %v327, %v326
    %v330 = vrot.slane %v313, 5
    %vm331 = vcmask 1043459
    %v332 = vsel %vm331, %v330, %v329
    %333 = vrot.lane.b32.xlu0 %v332, 32
    %v334 = vpop.permute.xlu0 %333
    %v336 = vsel %vm319, %v334, 0.0
    %v338 = vrot.slane %v336, 1
    %v339 = vrot.slane %v336, 2
    %v340 = vrot.slane %v336, 3
    %vm344 = vcmask 253952
    %345 = vst.msk [vmem:[#allocation8] sm:$0x1] %vm344, %v336
    %346 = vst.msk [vmem:[#allocation8 + $0x8] sm:$0x1] %vm344, %v338
    %347 = vst.msk [vmem:[#allocation8 + $0x10] sm:$0x1] %vm344, %v339
    %348 = vst.msk [vmem:[#allocation8 + $0x18] sm:$0x1] %vm344, %v340
    %v349 = vsel %vm82, %v334, 0
    %351 = vmatpush.msra.mxu0 0.0
    %352 = vmatpush.msra.mxu0 0.0
    %353 = vmatpush.msra.mxu0 0.0
    %354 = vmatpush.msra.mxu0 0.0
    %355 = vmatpush.msra.mxu0 0.0
    %356 = vmatpush.msra.mxu0 0.0
    %357 = vmatpush.msra.mxu0 0.0
    %358 = vmatpush.msra.mxu0 0.0
    %359 = vmatpush.msra.mxu0 0.0
    %360 = vmatpush.msra.mxu0 0.0
    %361 = vmatpush.msra.mxu0 0.0
    %362 = vmatpush.msra.mxu0 0.0
    %363 = vmatpush.msra.mxu0 %v75
    %364 = vmatpush.msra.mxu0 %v74
    %365 = vmatpush.msra.mxu0 %v73
    %366 = vmatpush.msra.mxu0 %v72
    %367 = vmatmul.f32.gmra.mxu0 %v349
    %v368 = vpop.f32.mrf.mxu0
    %v369 = vadd.f32 0.0, %v368
    %370 = vdwg.mxu0
    %v372 = vrot.slane %v369, 7
    %v373 = vrot.slane %v369, 1
    %v374 = vrot.slane %v369, 2
    %v379 = vadd.f32 %v127, %v372
    %v380 = vadd.f32 %v128, %v369
    %v381 = vadd.f32 %v129, %v373
    %v382 = vadd.f32 %v130, %v374
    %v383 = vxor.u32 %v379, 2147483648
    %v384 = vxor.u32 %v380, 2147483648
    %v385 = vxor.u32 %v381, 2147483648
    %v386 = vxor.u32 %v382, 2147483648
    %v387 = vmul.f32 %v383, 1.442695
    %v388 = vpow.pop %v387
    %v389 = vmul.f32 %v384, 1.442695
    %v390 = vpow.pop %v389
    %v391 = vmul.f32 %v385, 1.442695
    %v392 = vpow.pop %v391
    %v393 = vmul.f32 %v386, 1.442695
    %v394 = vpow.pop %v393
    %v395 = vadd.f32 %v388, 1.0
    %v396 = vadd.f32 %v390, 1.0
    %v397 = vadd.f32 %v392, 1.0
    %v398 = vadd.f32 %v394, 1.0
    %v399 = vrcp.pop %v395
    %v400 = vmul.f32 %v395, %v399
    %v401 = vsub.f32 1.0, %v400
    %v402 = vmul.f32 %v399, %v401
    %v403 = vadd.f32 %v399, %v402
    %vm404 = vweird.f32 %v395
    %vm405 = vweird.f32 %v399
    %vm406 = vmor %vm404, %vm405
    %v407 = vsel %vm406, %v399, %v403
    %v408 = vand.u32 2147483647, %v395
    %vm409 = vcmp.eq.f32.partialorder %v408, 8.507059e+37
    %v410 = vand.u32 %v395, 2147483648
    %v411 = vor.u32 1.1754944e-38, %v410
    %v412 = vsel %vm409, %v411, %v407
    %v413 = vmul.f32 1.0, %v412
    %v414 = vrcp.pop %v396
    %v415 = vmul.f32 %v396, %v414
    %v416 = vsub.f32 1.0, %v415
    %v417 = vmul.f32 %v414, %v416
    %v418 = vadd.f32 %v414, %v417
    %vm419 = vweird.f32 %v396
    %vm420 = vweird.f32 %v414
    %vm421 = vmor %vm419, %vm420
    %v422 = vsel %vm421, %v414, %v418
    %v423 = vand.u32 2147483647, %v396
    %vm424 = vcmp.eq.f32.partialorder %v423, 8.507059e+37
    %v425 = vand.u32 %v396, 2147483648
    %v426 = vor.u32 1.1754944e-38, %v425
    %v427 = vsel %vm424, %v426, %v422
    %v428 = vmul.f32 1.0, %v427
    %v429 = vrcp.pop %v397
    %v430 = vmul.f32 %v397, %v429
    %v431 = vsub.f32 1.0, %v430
    %v432 = vmul.f32 %v429, %v431
    %v433 = vadd.f32 %v429, %v432
    %vm434 = vweird.f32 %v397
    %vm435 = vweird.f32 %v429
    %vm436 = vmor %vm434, %vm435
    %v437 = vsel %vm436, %v429, %v433
    %v438 = vand.u32 2147483647, %v397
    %vm439 = vcmp.eq.f32.partialorder %v438, 8.507059e+37
    %v440 = vand.u32 %v397, 2147483648
    %v441 = vor.u32 1.1754944e-38, %v440
    %v442 = vsel %vm439, %v441, %v437
    %v443 = vmul.f32 1.0, %v442
    %v444 = vrcp.pop %v398
    %v445 = vmul.f32 %v398, %v444
    %v446 = vsub.f32 1.0, %v445
    %v447 = vmul.f32 %v444, %v446
    %v448 = vadd.f32 %v444, %v447
    %vm449 = vweird.f32 %v398
    %vm450 = vweird.f32 %v444
    %vm451 = vmor %vm449, %vm450
    %v452 = vsel %vm451, %v444, %v448
    %v453 = vand.u32 2147483647, %v398
    %vm454 = vcmp.eq.f32.partialorder %v453, 8.507059e+37
    %v455 = vand.u32 %v398, 2147483648
    %v456 = vor.u32 1.1754944e-38, %v455
    %v457 = vsel %vm454, %v456, %v452
    %v458 = vmul.f32 1.0, %v457
    %v459 = vtanh.pop %v379
    %v460 = vtanh.pop %v380
    %v461 = vtanh.pop %v381
    %v462 = vtanh.pop %v382
    %v467 = vrot.slane %v286, 7
    %v468 = vrot.slane %v287, 7
    %v469 = vrot.slane %v288, 7
    %v470 = vrot.slane %v289, 7
    %v475 = vmul.f32 %v413, %v467
    %v476 = vmul.f32 %v428, %v468
    %v477 = vmul.f32 %v443, %v469
    %v478 = vmul.f32 %v458, %v470
    %483 = vrot.lane.b32.xlu0 %v459, 64
    %v484 = vpop.permute.xlu0 %483
    %485 = vrot.lane.b32.xlu0 %v460, 64
    %v486 = vpop.permute.xlu0 %485
    %487 = vrot.lane.b32.xlu0 %v461, 64
    %v488 = vpop.permute.xlu0 %487
    %489 = vrot.lane.b32.xlu0 %v462, 64
    %v490 = vpop.permute.xlu0 %489
    %v495 = vmul.f32 %v413, %v484
    %v496 = vmul.f32 %v428, %v486
    %v497 = vmul.f32 %v443, %v488
    %v498 = vmul.f32 %v458, %v490
    %503 = vrot.lane.b32.xlu0 %v495, 32
    %v504 = vpop.permute.xlu0 %503
    %505 = vrot.lane.b32.xlu0 %v496, 32
    %v506 = vpop.permute.xlu0 %505
    %507 = vrot.lane.b32.xlu0 %v497, 32
    %v508 = vpop.permute.xlu0 %507
    %509 = vrot.lane.b32.xlu0 %v498, 32
    %v510 = vpop.permute.xlu0 %509
    %v515 = vadd.f32 %v475, %v504
    %v516 = vadd.f32 %v476, %v506
    %v517 = vadd.f32 %v477, %v508
    %v518 = vadd.f32 %v478, %v510
    %v519 = vtanh.pop %v515
    %v520 = vtanh.pop %v516
    %v521 = vtanh.pop %v517
    %v522 = vtanh.pop %v518
    %527 = vrot.lane.b32.xlu0 %v519, 64
    %v528 = vpop.permute.xlu0 %527
    %529 = vrot.lane.b32.xlu0 %v520, 64
    %v530 = vpop.permute.xlu0 %529
    %531 = vrot.lane.b32.xlu0 %v521, 64
    %v532 = vpop.permute.xlu0 %531
    %533 = vrot.lane.b32.xlu0 %v522, 64
    %v534 = vpop.permute.xlu0 %533
    %v539 = vmul.f32 %v413, %v528
    %v540 = vmul.f32 %v428, %v530
    %v541 = vmul.f32 %v443, %v532
    %v542 = vmul.f32 %v458, %v534
    %vm543 = vcmp.gt.s32.totalorder %v77, 1
    %v544 = vsel %vm543, 1, 0
    %545 = vset.pattern.permute.xlu0 0
    %546 = vperm.xlu0 %545, %v544
    %v547 = vpop.permute.xlu0 %546
    %vm548 = vcmp.eq.s32.totalorder %v547, 1
    %v553 = vrot.slane %v539, 1
    %v554 = vsel %vm325, %v540, %v553
    %v555 = vrot.slane %v541, 7
    %v556 = vsel %vm328, %v555, %v554
    %v557 = vrot.slane %v542, 6
    %v558 = vsel %vm331, %v557, %v556
    %559 = vrot.lane.b32.xlu0 %v558, 32
    %v560 = vpop.permute.xlu0 %559
    %v562 = vsel %vm548, %v560, 0.0
    %v564 = vrot.slane %v562, 1
    %v565 = vrot.slane %v562, 2
    %v566 = vrot.slane %v562, 3
    %570 = vst.msk [vmem:[#allocation8 + $0x1] sm:$0x1] %vm344, %v562
    %571 = vst.msk [vmem:[#allocation8 + $0x9] sm:$0x1] %vm344, %v564
    %572 = vst.msk [vmem:[#allocation8 + $0x11] sm:$0x1] %vm344, %v565
    %573 = vst.msk [vmem:[#allocation8 + $0x19] sm:$0x1] %vm344, %v566
    %v574 = vsel %vm82, %v560, 0
    %576 = vmatpush.msra.mxu0 0.0
    %577 = vmatpush.msra.mxu0 0.0
    %578 = vmatpush.msra.mxu0 0.0
    %579 = vmatpush.msra.mxu0 0.0
    %580 = vmatpush.msra.mxu0 0.0
    %581 = vmatpush.msra.mxu0 0.0
    %582 = vmatpush.msra.mxu0 0.0
    %583 = vmatpush.msra.mxu0 0.0
    %584 = vmatpush.msra.mxu0 0.0
    %585 = vmatpush.msra.mxu0 0.0
    %586 = vmatpush.msra.mxu0 0.0
    %587 = vmatpush.msra.mxu0 0.0
    %588 = vmatpush.msra.mxu0 %v75
    %589 = vmatpush.msra.mxu0 %v74
    %590 = vmatpush.msra.mxu0 %v73
    %591 = vmatpush.msra.mxu0 %v72
    %592 = vmatmul.f32.gmra.mxu0 %v574
    %v593 = vpop.f32.mrf.mxu0
    %v594 = vadd.f32 0.0, %v593
    %595 = vdwg.mxu0
    %v597 = vrot.slane %v594, 6
    %v598 = vrot.slane %v594, 7
    %v599 = vrot.slane %v594, 1
    %v604 = vadd.f32 %v127, %v597
    %v605 = vadd.f32 %v128, %v598
    %v606 = vadd.f32 %v129, %v594
    %v607 = vadd.f32 %v130, %v599
    %v608 = vxor.u32 %v604, 2147483648
    %v609 = vxor.u32 %v605, 2147483648
    %v610 = vxor.u32 %v606, 2147483648
    %v611 = vxor.u32 %v607, 2147483648
    %v612 = vmul.f32 %v608, 1.442695
    %v613 = vpow.pop %v612
    %v614 = vmul.f32 %v609, 1.442695
    %v615 = vpow.pop %v614
    %v616 = vmul.f32 %v610, 1.442695
    %v617 = vpow.pop %v616
    %v618 = vmul.f32 %v611, 1.442695
    %v619 = vpow.pop %v618
    %v620 = vadd.f32 %v613, 1.0
    %v621 = vadd.f32 %v615, 1.0
    %v622 = vadd.f32 %v617, 1.0
    %v623 = vadd.f32 %v619, 1.0
    %v624 = vrcp.pop %v620
    %v625 = vmul.f32 %v620, %v624
    %v626 = vsub.f32 1.0, %v625
    %v627 = vmul.f32 %v624, %v626
    %v628 = vadd.f32 %v624, %v627
    %vm629 = vweird.f32 %v620
    %vm630 = vweird.f32 %v624
    %vm631 = vmor %vm629, %vm630
    %v632 = vsel %vm631, %v624, %v628
    %v633 = vand.u32 2147483647, %v620
    %vm634 = vcmp.eq.f32.partialorder %v633, 8.507059e+37
    %v635 = vand.u32 %v620, 2147483648
    %v636 = vor.u32 1.1754944e-38, %v635
    %v637 = vsel %vm634, %v636, %v632
    %v638 = vmul.f32 1.0, %v637
    %v639 = vrcp.pop %v621
    %v640 = vmul.f32 %v621, %v639
    %v641 = vsub.f32 1.0, %v640
    %v642 = vmul.f32 %v639, %v641
    %v643 = vadd.f32 %v639, %v642
    %vm644 = vweird.f32 %v621
    %vm645 = vweird.f32 %v639
    %vm646 = vmor %vm644, %vm645
    %v647 = vsel %vm646, %v639, %v643
    %v648 = vand.u32 2147483647, %v621
    %vm649 = vcmp.eq.f32.partialorder %v648, 8.507059e+37
    %v650 = vand.u32 %v621, 2147483648
    %v651 = vor.u32 1.1754944e-38, %v650
    %v652 = vsel %vm649, %v651, %v647
    %v653 = vmul.f32 1.0, %v652
    %v654 = vrcp.pop %v622
    %v655 = vmul.f32 %v622, %v654
    %v656 = vsub.f32 1.0, %v655
    %v657 = vmul.f32 %v654, %v656
    %v658 = vadd.f32 %v654, %v657
    %vm659 = vweird.f32 %v622
    %vm660 = vweird.f32 %v654
    %vm661 = vmor %vm659, %vm660
    %v662 = vsel %vm661, %v654, %v658
    %v663 = vand.u32 2147483647, %v622
    %vm664 = vcmp.eq.f32.partialorder %v663, 8.507059e+37
    %v665 = vand.u32 %v622, 2147483648
    %v666 = vor.u32 1.1754944e-38, %v665
    %v667 = vsel %vm664, %v666, %v662
    %v668 = vmul.f32 1.0, %v667
    %v669 = vrcp.pop %v623
    %v670 = vmul.f32 %v623, %v669
    %v671 = vsub.f32 1.0, %v670
    %v672 = vmul.f32 %v669, %v671
    %v673 = vadd.f32 %v669, %v672
    %vm674 = vweird.f32 %v623
    %vm675 = vweird.f32 %v669
    %vm676 = vmor %vm674, %vm675
    %v677 = vsel %vm676, %v669, %v673
    %v678 = vand.u32 2147483647, %v623
    %vm679 = vcmp.eq.f32.partialorder %v678, 8.507059e+37
    %v680 = vand.u32 %v623, 2147483648
    %v681 = vor.u32 1.1754944e-38, %v680
    %v682 = vsel %vm679, %v681, %v677
    %v683 = vmul.f32 1.0, %v682
    %v684 = vtanh.pop %v604
    %v685 = vtanh.pop %v605
    %v686 = vtanh.pop %v606
    %v687 = vtanh.pop %v607
    %v692 = vrot.slane %v515, 7
    %v693 = vrot.slane %v516, 7
    %v694 = vrot.slane %v517, 7
    %v695 = vrot.slane %v518, 7
    %v700 = vmul.f32 %v638, %v692
    %v701 = vmul.f32 %v653, %v693
    %v702 = vmul.f32 %v668, %v694
    %v703 = vmul.f32 %v683, %v695
    %708 = vrot.lane.b32.xlu0 %v684, 64
    %v709 = vpop.permute.xlu0 %708
    %710 = vrot.lane.b32.xlu0 %v685, 64
    %v711 = vpop.permute.xlu0 %710
    %712 = vrot.lane.b32.xlu0 %v686, 64
    %v713 = vpop.permute.xlu0 %712
    %714 = vrot.lane.b32.xlu0 %v687, 64
    %v715 = vpop.permute.xlu0 %714
    %v720 = vmul.f32 %v638, %v709
    %v721 = vmul.f32 %v653, %v711
    %v722 = vmul.f32 %v668, %v713
    %v723 = vmul.f32 %v683, %v715
    %728 = vrot.lane.b32.xlu0 %v720, 32
    %v729 = vpop.permute.xlu0 %728
    %730 = vrot.lane.b32.xlu0 %v721, 32
    %v731 = vpop.permute.xlu0 %730
    %732 = vrot.lane.b32.xlu0 %v722, 32
    %v733 = vpop.permute.xlu0 %732
    %734 = vrot.lane.b32.xlu0 %v723, 32
    %v735 = vpop.permute.xlu0 %734
    %v740 = vadd.f32 %v700, %v729
    %v741 = vadd.f32 %v701, %v731
    %v742 = vadd.f32 %v702, %v733
    %v743 = vadd.f32 %v703, %v735
    %v744 = vtanh.pop %v740
    %v745 = vtanh.pop %v741
    %v746 = vtanh.pop %v742
    %v747 = vtanh.pop %v743
    %752 = vrot.lane.b32.xlu0 %v744, 64
    %v753 = vpop.permute.xlu0 %752
    %754 = vrot.lane.b32.xlu0 %v745, 64
    %v755 = vpop.permute.xlu0 %754
    %756 = vrot.lane.b32.xlu0 %v746, 64
    %v757 = vpop.permute.xlu0 %756
    %758 = vrot.lane.b32.xlu0 %v747, 64
    %v759 = vpop.permute.xlu0 %758
    %v764 = vmul.f32 %v638, %v753
    %v765 = vmul.f32 %v653, %v755
    %v766 = vmul.f32 %v668, %v757
    %v767 = vmul.f32 %v683, %v759
    %vm768 = vcmp.gt.s32.totalorder %v77, 2
    %v769 = vsel %vm768, 1, 0
    %770 = vset.pattern.permute.xlu0 0
    %771 = vperm.xlu0 %770, %v769
    %v772 = vpop.permute.xlu0 %771
    %vm773 = vcmp.eq.s32.totalorder %v772, 1
    %v778 = vrot.slane %v764, 2
    %v779 = vrot.slane %v765, 1
    %v780 = vsel %vm325, %v779, %v778
    %v781 = vsel %vm328, %v766, %v780
    %v782 = vrot.slane %v767, 7
    %v783 = vsel %vm331, %v782, %v781
    %784 = vrot.lane.b32.xlu0 %v783, 32
    %v785 = vpop.permute.xlu0 %784
    %v787 = vsel %vm773, %v785, 0.0
    %v789 = vrot.slane %v787, 1
    %v790 = vrot.slane %v787, 2
    %v791 = vrot.slane %v787, 3
    %795 = vst.msk [vmem:[#allocation8 + $0x2] sm:$0x1] %vm344, %v787
    %796 = vst.msk [vmem:[#allocation8 + $0xa] sm:$0x1] %vm344, %v789
    %797 = vst.msk [vmem:[#allocation8 + $0x12] sm:$0x1] %vm344, %v790
    %798 = vst.msk [vmem:[#allocation8 + $0x1a] sm:$0x1] %vm344, %v791
    %v799 = vsel %vm82, %v785, 0
    %801 = vmatpush.msra.mxu0 0.0
    %802 = vmatpush.msra.mxu0 0.0
    %803 = vmatpush.msra.mxu0 0.0
    %804 = vmatpush.msra.mxu0 0.0
    %805 = vmatpush.msra.mxu0 0.0
    %806 = vmatpush.msra.mxu0 0.0
    %807 = vmatpush.msra.mxu0 0.0
    %808 = vmatpush.msra.mxu0 0.0
    %809 = vmatpush.msra.mxu0 0.0
    %810 = vmatpush.msra.mxu0 0.0
    %811 = vmatpush.msra.mxu0 0.0
    %812 = vmatpush.msra.mxu0 0.0
    %813 = vmatpush.msra.mxu0 %v75
    %814 = vmatpush.msra.mxu0 %v74
    %815 = vmatpush.msra.mxu0 %v73
    %816 = vmatpush.msra.mxu0 %v72
    %817 = vmatmul.f32.gmra.mxu0 %v799
    %v818 = vpop.f32.mrf.mxu0
    %v819 = vadd.f32 0.0, %v818
    %820 = vdwg.mxu0
    %v822 = vrot.slane %v819, 5
    %v823 = vrot.slane %v819, 6
    %v824 = vrot.slane %v819, 7
    %v829 = vadd.f32 %v127, %v822
    %v830 = vadd.f32 %v128, %v823
    %v831 = vadd.f32 %v129, %v824
    %v832 = vadd.f32 %v130, %v819
    %v833 = vxor.u32 %v829, 2147483648
    %v834 = vxor.u32 %v830, 2147483648
    %v835 = vxor.u32 %v831, 2147483648
    %v836 = vxor.u32 %v832, 2147483648
    %v837 = vmul.f32 %v833, 1.442695
    %v838 = vpow.pop %v837
    %v839 = vmul.f32 %v834, 1.442695
    %v840 = vpow.pop %v839
    %v841 = vmul.f32 %v835, 1.442695
    %v842 = vpow.pop %v841
    %v843 = vmul.f32 %v836, 1.442695
    %v844 = vpow.pop %v843
    %v845 = vadd.f32 %v838, 1.0
    %v846 = vadd.f32 %v840, 1.0
    %v847 = vadd.f32 %v842, 1.0
    %v848 = vadd.f32 %v844, 1.0
    %v849 = vrcp.pop %v845
    %v850 = vmul.f32 %v845, %v849
    %v851 = vsub.f32 1.0, %v850
    %v852 = vmul.f32 %v849, %v851
    %v853 = vadd.f32 %v849, %v852
    %vm854 = vweird.f32 %v845
    %vm855 = vweird.f32 %v849
    %vm856 = vmor %vm854, %vm855
    %v857 = vsel %vm856, %v849, %v853
    %v858 = vand.u32 2147483647, %v845
    %vm859 = vcmp.eq.f32.partialorder %v858, 8.507059e+37
    %v860 = vand.u32 %v845, 2147483648
    %v861 = vor.u32 1.1754944e-38, %v860
    %v862 = vsel %vm859, %v861, %v857
    %v863 = vmul.f32 1.0, %v862
    %v864 = vrcp.pop %v846
    %v865 = vmul.f32 %v846, %v864
    %v866 = vsub.f32 1.0, %v865
    %v867 = vmul.f32 %v864, %v866
    %v868 = vadd.f32 %v864, %v867
    %vm869 = vweird.f32 %v846
    %vm870 = vweird.f32 %v864
    %vm871 = vmor %vm869, %vm870
    %v872 = vsel %vm871, %v864, %v868
    %v873 = vand.u32 2147483647, %v846
    %vm874 = vcmp.eq.f32.partialorder %v873, 8.507059e+37
    %v875 = vand.u32 %v846, 2147483648
    %v876 = vor.u32 1.1754944e-38, %v875
    %v877 = vsel %vm874, %v876, %v872
    %v878 = vmul.f32 1.0, %v877
    %v879 = vrcp.pop %v847
    %v880 = vmul.f32 %v847, %v879
    %v881 = vsub.f32 1.0, %v880
    %v882 = vmul.f32 %v879, %v881
    %v883 = vadd.f32 %v879, %v882
    %vm884 = vweird.f32 %v847
    %vm885 = vweird.f32 %v879
    %vm886 = vmor %vm884, %vm885
    %v887 = vsel %vm886, %v879, %v883
    %v888 = vand.u32 2147483647, %v847
    %vm889 = vcmp.eq.f32.partialorder %v888, 8.507059e+37
    %v890 = vand.u32 %v847, 2147483648
    %v891 = vor.u32 1.1754944e-38, %v890
    %v892 = vsel %vm889, %v891, %v887
    %v893 = vmul.f32 1.0, %v892
    %v894 = vrcp.pop %v848
    %v895 = vmul.f32 %v848, %v894
    %v896 = vsub.f32 1.0, %v895
    %v897 = vmul.f32 %v894, %v896
    %v898 = vadd.f32 %v894, %v897
    %vm899 = vweird.f32 %v848
    %vm900 = vweird.f32 %v894
    %vm901 = vmor %vm899, %vm900
    %v902 = vsel %vm901, %v894, %v898
    %v903 = vand.u32 2147483647, %v848
    %vm904 = vcmp.eq.f32.partialorder %v903, 8.507059e+37
    %v905 = vand.u32 %v848, 2147483648
    %v906 = vor.u32 1.1754944e-38, %v905
    %v907 = vsel %vm904, %v906, %v902
    %v908 = vmul.f32 1.0, %v907
    %v909 = vtanh.pop %v829
    %v910 = vtanh.pop %v830
    %v911 = vtanh.pop %v831
    %v912 = vtanh.pop %v832
    %v917 = vrot.slane %v740, 7
    %v918 = vrot.slane %v741, 7
    %v919 = vrot.slane %v742, 7
    %v920 = vrot.slane %v743, 7
    %v925 = vmul.f32 %v863, %v917
    %v926 = vmul.f32 %v878, %v918
    %v927 = vmul.f32 %v893, %v919
    %v928 = vmul.f32 %v908, %v920
    %933 = vrot.lane.b32.xlu0 %v909, 64
    %v934 = vpop.permute.xlu0 %933
    %935 = vrot.lane.b32.xlu0 %v910, 64
    %v936 = vpop.permute.xlu0 %935
    %937 = vrot.lane.b32.xlu0 %v911, 64
    %v938 = vpop.permute.xlu0 %937
    %939 = vrot.lane.b32.xlu0 %v912, 64
    %v940 = vpop.permute.xlu0 %939
    %v945 = vmul.f32 %v863, %v934
    %v946 = vmul.f32 %v878, %v936
    %v947 = vmul.f32 %v893, %v938
    %v948 = vmul.f32 %v908, %v940
    %953 = vrot.lane.b32.xlu0 %v945, 32
    %v954 = vpop.permute.xlu0 %953
    %955 = vrot.lane.b32.xlu0 %v946, 32
    %v956 = vpop.permute.xlu0 %955
    %957 = vrot.lane.b32.xlu0 %v947, 32
    %v958 = vpop.permute.xlu0 %957
    %959 = vrot.lane.b32.xlu0 %v948, 32
    %v960 = vpop.permute.xlu0 %959
    %v965 = vadd.f32 %v925, %v954
    %v966 = vadd.f32 %v926, %v956
    %v967 = vadd.f32 %v927, %v958
    %v968 = vadd.f32 %v928, %v960
    %v969 = vtanh.pop %v965
    %v970 = vtanh.pop %v966
    %v971 = vtanh.pop %v967
    %v972 = vtanh.pop %v968
    %977 = vrot.lane.b32.xlu0 %v969, 64
    %v978 = vpop.permute.xlu0 %977
    %979 = vrot.lane.b32.xlu0 %v970, 64
    %v980 = vpop.permute.xlu0 %979
    %981 = vrot.lane.b32.xlu0 %v971, 64
    %v982 = vpop.permute.xlu0 %981
    %983 = vrot.lane.b32.xlu0 %v972, 64
    %v984 = vpop.permute.xlu0 %983
    %v989 = vmul.f32 %v863, %v978
    %v990 = vmul.f32 %v878, %v980
    %v991 = vmul.f32 %v893, %v982
    %v992 = vmul.f32 %v908, %v984
    %vm993 = vcmp.gt.s32.totalorder %v77, 3
    %v994 = vsel %vm993, 1, 0
    %995 = vset.pattern.permute.xlu0 0
    %996 = vperm.xlu0 %995, %v994
    %v997 = vpop.permute.xlu0 %996
    %vm998 = vcmp.eq.s32.totalorder %v997, 1
    %v1003 = vrot.slane %v989, 3
    %v1004 = vrot.slane %v990, 2
    %v1005 = vsel %vm325, %v1004, %v1003
    %v1006 = vrot.slane %v991, 1
    %v1007 = vsel %vm328, %v1006, %v1005
    %v1008 = vsel %vm331, %v992, %v1007
    %1009 = vrot.lane.b32.xlu0 %v1008, 32
    %v1010 = vpop.permute.xlu0 %1009
    %v1012 = vsel %vm998, %v1010, 0.0
    %v1014 = vrot.slane %v1012, 1
    %v1015 = vrot.slane %v1012, 2
    %v1016 = vrot.slane %v1012, 3
    %1020 = vst.msk [vmem:[#allocation8 + $0x3] sm:$0x1] %vm344, %v1012
    %1021 = vst.msk [vmem:[#allocation8 + $0xb] sm:$0x1] %vm344, %v1014
    %1022 = vst.msk [vmem:[#allocation8 + $0x13] sm:$0x1] %vm344, %v1015
    %1023 = vst.msk [vmem:[#allocation8 + $0x1b] sm:$0x1] %vm344, %v1016
    %v1024 = vsel %vm82, %v1010, 0
    %1026 = vmatpush.msra.mxu0 0.0
    %1027 = vmatpush.msra.mxu0 0.0
    %1028 = vmatpush.msra.mxu0 0.0
    %1029 = vmatpush.msra.mxu0 0.0
    %1030 = vmatpush.msra.mxu0 0.0
    %1031 = vmatpush.msra.mxu0 0.0
    %1032 = vmatpush.msra.mxu0 0.0
    %1033 = vmatpush.msra.mxu0 0.0
    %1034 = vmatpush.msra.mxu0 0.0
    %1035 = vmatpush.msra.mxu0 0.0
    %1036 = vmatpush.msra.mxu0 0.0
    %1037 = vmatpush.msra.mxu0 0.0
    %1038 = vmatpush.msra.mxu0 %v75
    %1039 = vmatpush.msra.mxu0 %v74
    %1040 = vmatpush.msra.mxu0 %v73
    %1041 = vmatpush.msra.mxu0 %v72
    %1042 = vmatmul.f32.gmra.mxu0 %v1024
    %v1043 = vpop.f32.mrf.mxu0
    %v1044 = vadd.f32 0.0, %v1043
    %1045 = vdwg.mxu0
    %v1047 = vrot.slane %v1044, 4
    %v1048 = vrot.slane %v1044, 5
    %v1049 = vrot.slane %v1044, 6
    %v1050 = vrot.slane %v1044, 7
    %v1055 = vadd.f32 %v127, %v1047
    %v1056 = vadd.f32 %v128, %v1048
    %v1057 = vadd.f32 %v129, %v1049
    %v1058 = vadd.f32 %v130, %v1050
    %v1059 = vxor.u32 %v1055, 2147483648
    %v1060 = vxor.u32 %v1056, 2147483648
    %v1061 = vxor.u32 %v1057, 2147483648
    %v1062 = vxor.u32 %v1058, 2147483648
    %v1063 = vmul.f32 %v1059, 1.442695
    %v1064 = vpow.pop %v1063
    %v1065 = vmul.f32 %v1060, 1.442695
    %v1066 = vpow.pop %v1065
    %v1067 = vmul.f32 %v1061, 1.442695
    %v1068 = vpow.pop %v1067
    %v1069 = vmul.f32 %v1062, 1.442695
    %v1070 = vpow.pop %v1069
    %v1071 = vadd.f32 %v1064, 1.0
    %v1072 = vadd.f32 %v1066, 1.0
    %v1073 = vadd.f32 %v1068, 1.0
    %v1074 = vadd.f32 %v1070, 1.0
    %v1075 = vrcp.pop %v1071
    %v1076 = vmul.f32 %v1071, %v1075
    %v1077 = vsub.f32 1.0, %v1076
    %v1078 = vmul.f32 %v1075, %v1077
    %v1079 = vadd.f32 %v1075, %v1078
    %vm1080 = vweird.f32 %v1071
    %vm1081 = vweird.f32 %v1075
    %vm1082 = vmor %vm1080, %vm1081
    %v1083 = vsel %vm1082, %v1075, %v1079
    %v1084 = vand.u32 2147483647, %v1071
    %vm1085 = vcmp.eq.f32.partialorder %v1084, 8.507059e+37
    %v1086 = vand.u32 %v1071, 2147483648
    %v1087 = vor.u32 1.1754944e-38, %v1086
    %v1088 = vsel %vm1085, %v1087, %v1083
    %v1089 = vmul.f32 1.0, %v1088
    %v1090 = vrcp.pop %v1072
    %v1091 = vmul.f32 %v1072, %v1090
    %v1092 = vsub.f32 1.0, %v1091
    %v1093 = vmul.f32 %v1090, %v1092
    %v1094 = vadd.f32 %v1090, %v1093
    %vm1095 = vweird.f32 %v1072
    %vm1096 = vweird.f32 %v1090
    %vm1097 = vmor %vm1095, %vm1096
    %v1098 = vsel %vm1097, %v1090, %v1094
    %v1099 = vand.u32 2147483647, %v1072
    %vm1100 = vcmp.eq.f32.partialorder %v1099, 8.507059e+37
    %v1101 = vand.u32 %v1072, 2147483648
    %v1102 = vor.u32 1.1754944e-38, %v1101
    %v1103 = vsel %vm1100, %v1102, %v1098
    %v1104 = vmul.f32 1.0, %v1103
    %v1105 = vrcp.pop %v1073
    %v1106 = vmul.f32 %v1073, %v1105
    %v1107 = vsub.f32 1.0, %v1106
    %v1108 = vmul.f32 %v1105, %v1107
    %v1109 = vadd.f32 %v1105, %v1108
    %vm1110 = vweird.f32 %v1073
    %vm1111 = vweird.f32 %v1105
    %vm1112 = vmor %vm1110, %vm1111
    %v1113 = vsel %vm1112, %v1105, %v1109
    %v1114 = vand.u32 2147483647, %v1073
    %vm1115 = vcmp.eq.f32.partialorder %v1114, 8.507059e+37
    %v1116 = vand.u32 %v1073, 2147483648
    %v1117 = vor.u32 1.1754944e-38, %v1116
    %v1118 = vsel %vm1115, %v1117, %v1113
    %v1119 = vmul.f32 1.0, %v1118
    %v1120 = vrcp.pop %v1074
    %v1121 = vmul.f32 %v1074, %v1120
    %v1122 = vsub.f32 1.0, %v1121
    %v1123 = vmul.f32 %v1120, %v1122
    %v1124 = vadd.f32 %v1120, %v1123
    %vm1125 = vweird.f32 %v1074
    %vm1126 = vweird.f32 %v1120
    %vm1127 = vmor %vm1125, %vm1126
    %v1128 = vsel %vm1127, %v1120, %v1124
    %v1129 = vand.u32 2147483647, %v1074
    %vm1130 = vcmp.eq.f32.partialorder %v1129, 8.507059e+37
    %v1131 = vand.u32 %v1074, 2147483648
    %v1132 = vor.u32 1.1754944e-38, %v1131
    %v1133 = vsel %vm1130, %v1132, %v1128
    %v1134 = vmul.f32 1.0, %v1133
    %v1135 = vtanh.pop %v1055
    %v1136 = vtanh.pop %v1056
    %v1137 = vtanh.pop %v1057
    %v1138 = vtanh.pop %v1058
    %v1143 = vrot.slane %v965, 7
    %v1144 = vrot.slane %v966, 7
    %v1145 = vrot.slane %v967, 7
    %v1146 = vrot.slane %v968, 7
    %v1151 = vmul.f32 %v1089, %v1143
    %v1152 = vmul.f32 %v1104, %v1144
    %v1153 = vmul.f32 %v1119, %v1145
    %v1154 = vmul.f32 %v1134, %v1146
    %1159 = vrot.lane.b32.xlu0 %v1135, 64
    %v1160 = vpop.permute.xlu0 %1159
    %1161 = vrot.lane.b32.xlu0 %v1136, 64
    %v1162 = vpop.permute.xlu0 %1161
    %1163 = vrot.lane.b32.xlu0 %v1137, 64
    %v1164 = vpop.permute.xlu0 %1163
    %1165 = vrot.lane.b32.xlu0 %v1138, 64
    %v1166 = vpop.permute.xlu0 %1165
    %v1171 = vmul.f32 %v1089, %v1160
    %v1172 = vmul.f32 %v1104, %v1162
    %v1173 = vmul.f32 %v1119, %v1164
    %v1174 = vmul.f32 %v1134, %v1166
    %1179 = vrot.lane.b32.xlu0 %v1171, 32
    %v1180 = vpop.permute.xlu0 %1179
    %1181 = vrot.lane.b32.xlu0 %v1172, 32
    %v1182 = vpop.permute.xlu0 %1181
    %1183 = vrot.lane.b32.xlu0 %v1173, 32
    %v1184 = vpop.permute.xlu0 %1183
    %1185 = vrot.lane.b32.xlu0 %v1174, 32
    %v1186 = vpop.permute.xlu0 %1185
    %v1191 = vadd.f32 %v1151, %v1180
    %v1192 = vadd.f32 %v1152, %v1182
    %v1193 = vadd.f32 %v1153, %v1184
    %v1194 = vadd.f32 %v1154, %v1186
    %v1195 = vtanh.pop %v1191
    %v1196 = vtanh.pop %v1192
    %v1197 = vtanh.pop %v1193
    %v1198 = vtanh.pop %v1194
    %1203 = vrot.lane.b32.xlu0 %v1195, 64
    %v1204 = vpop.permute.xlu0 %1203
    %1205 = vrot.lane.b32.xlu0 %v1196, 64
    %v1206 = vpop.permute.xlu0 %1205
    %1207 = vrot.lane.b32.xlu0 %v1197, 64
    %v1208 = vpop.permute.xlu0 %1207
    %1209 = vrot.lane.b32.xlu0 %v1198, 64
    %v1210 = vpop.permute.xlu0 %1209
    %v1215 = vmul.f32 %v1089, %v1204
    %v1216 = vmul.f32 %v1104, %v1206
    %v1217 = vmul.f32 %v1119, %v1208
    %v1218 = vmul.f32 %v1134, %v1210
    %vm1219 = vcmp.gt.s32.totalorder %v77, 4
    %v1220 = vsel %vm1219, 1, 0
    %1221 = vset.pattern.permute.xlu0 0
    %1222 = vperm.xlu0 %1221, %v1220
    %v1223 = vpop.permute.xlu0 %1222
    %vm1224 = vcmp.eq.s32.totalorder %v1223, 1
    %v1229 = vrot.slane %v1215, 4
    %v1230 = vrot.slane %v1216, 3
    %v1231 = vsel %vm325, %v1230, %v1229
    %v1232 = vrot.slane %v1217, 2
    %v1233 = vsel %vm328, %v1232, %v1231
    %v1234 = vrot.slane %v1218, 1
    %v1235 = vsel %vm331, %v1234, %v1233
    %1236 = vrot.lane.b32.xlu0 %v1235, 32
    %v1237 = vpop.permute.xlu0 %1236
    %v1239 = vsel %vm1224, %v1237, 0.0
    %v1241 = vrot.slane %v1239, 1
    %v1242 = vrot.slane %v1239, 2
    %v1243 = vrot.slane %v1239, 3
    %1247 = vst.msk [vmem:[#allocation8 + $0x4] sm:$0x1] %vm344, %v1239
    %1248 = vst.msk [vmem:[#allocation8 + $0xc] sm:$0x1] %vm344, %v1241
    %1249 = vst.msk [vmem:[#allocation8 + $0x14] sm:$0x1] %vm344, %v1242
    %1250 = vst.msk [vmem:[#allocation8 + $0x1c] sm:$0x1] %vm344, %v1243
    %v1251 = vsel %vm82, %v1237, 0
    %1253 = vmatpush.msra.mxu0 0.0
    %1254 = vmatpush.msra.mxu0 0.0
    %1255 = vmatpush.msra.mxu0 0.0
    %1256 = vmatpush.msra.mxu0 0.0
    %1257 = vmatpush.msra.mxu0 0.0
    %1258 = vmatpush.msra.mxu0 0.0
    %1259 = vmatpush.msra.mxu0 0.0
    %1260 = vmatpush.msra.mxu0 0.0
    %1261 = vmatpush.msra.mxu0 0.0
    %1262 = vmatpush.msra.mxu0 0.0
    %1263 = vmatpush.msra.mxu0 0.0
    %1264 = vmatpush.msra.mxu0 0.0
    %1265 = vmatpush.msra.mxu0 %v75
    %1266 = vmatpush.msra.mxu0 %v74
    %1267 = vmatpush.msra.mxu0 %v73
    %1268 = vmatpush.msra.mxu0 %v72
    %1269 = vmatmul.f32.gmra.mxu0 %v1251
    %v1270 = vpop.f32.mrf.mxu0
    %v1271 = vadd.f32 0.0, %v1270
    %1272 = vdwg.mxu0
    %v1274 = vrot.slane %v1271, 3
    %v1275 = vrot.slane %v1271, 4
    %v1276 = vrot.slane %v1271, 5
    %v1277 = vrot.slane %v1271, 6
    %v1282 = vadd.f32 %v127, %v1274
    %v1283 = vadd.f32 %v128, %v1275
    %v1284 = vadd.f32 %v129, %v1276
    %v1285 = vadd.f32 %v130, %v1277
    %v1286 = vxor.u32 %v1282, 2147483648
    %v1287 = vxor.u32 %v1283, 2147483648
    %v1288 = vxor.u32 %v1284, 2147483648
    %v1289 = vxor.u32 %v1285, 2147483648
    %v1290 = vmul.f32 %v1286, 1.442695
    %v1291 = vpow.pop %v1290
    %v1292 = vmul.f32 %v1287, 1.442695
    %v1293 = vpow.pop %v1292
    %v1294 = vmul.f32 %v1288, 1.442695
    %v1295 = vpow.pop %v1294
    %v1296 = vmul.f32 %v1289, 1.442695
    %v1297 = vpow.pop %v1296
    %v1298 = vadd.f32 %v1291, 1.0
    %v1299 = vadd.f32 %v1293, 1.0
    %v1300 = vadd.f32 %v1295, 1.0
    %v1301 = vadd.f32 %v1297, 1.0
    %v1302 = vrcp.pop %v1298
    %v1303 = vmul.f32 %v1298, %v1302
    %v1304 = vsub.f32 1.0, %v1303
    %v1305 = vmul.f32 %v1302, %v1304
    %v1306 = vadd.f32 %v1302, %v1305
    %vm1307 = vweird.f32 %v1298
    %vm1308 = vweird.f32 %v1302
    %vm1309 = vmor %vm1307, %vm1308
    %v1310 = vsel %vm1309, %v1302, %v1306
    %v1311 = vand.u32 2147483647, %v1298
    %vm1312 = vcmp.eq.f32.partialorder %v1311, 8.507059e+37
    %v1313 = vand.u32 %v1298, 2147483648
    %v1314 = vor.u32 1.1754944e-38, %v1313
    %v1315 = vsel %vm1312, %v1314, %v1310
    %v1316 = vmul.f32 1.0, %v1315
    %v1317 = vrcp.pop %v1299
    %v1318 = vmul.f32 %v1299, %v1317
    %v1319 = vsub.f32 1.0, %v1318
    %v1320 = vmul.f32 %v1317, %v1319
    %v1321 = vadd.f32 %v1317, %v1320
    %vm1322 = vweird.f32 %v1299
    %vm1323 = vweird.f32 %v1317
    %vm1324 = vmor %vm1322, %vm1323
    %v1325 = vsel %vm1324, %v1317, %v1321
    %v1326 = vand.u32 2147483647, %v1299
    %vm1327 = vcmp.eq.f32.partialorder %v1326, 8.507059e+37
    %v1328 = vand.u32 %v1299, 2147483648
    %v1329 = vor.u32 1.1754944e-38, %v1328
    %v1330 = vsel %vm1327, %v1329, %v1325
    %v1331 = vmul.f32 1.0, %v1330
    %v1332 = vrcp.pop %v1300
    %v1333 = vmul.f32 %v1300, %v1332
    %v1334 = vsub.f32 1.0, %v1333
    %v1335 = vmul.f32 %v1332, %v1334
    %v1336 = vadd.f32 %v1332, %v1335
    %vm1337 = vweird.f32 %v1300
    %vm1338 = vweird.f32 %v1332
    %vm1339 = vmor %vm1337, %vm1338
    %v1340 = vsel %vm1339, %v1332, %v1336
    %v1341 = vand.u32 2147483647, %v1300
    %vm1342 = vcmp.eq.f32.partialorder %v1341, 8.507059e+37
    %v1343 = vand.u32 %v1300, 2147483648
    %v1344 = vor.u32 1.1754944e-38, %v1343
    %v1345 = vsel %vm1342, %v1344, %v1340
    %v1346 = vmul.f32 1.0, %v1345
    %v1347 = vrcp.pop %v1301
    %v1348 = vmul.f32 %v1301, %v1347
    %v1349 = vsub.f32 1.0, %v1348
    %v1350 = vmul.f32 %v1347, %v1349
    %v1351 = vadd.f32 %v1347, %v1350
    %vm1352 = vweird.f32 %v1301
    %vm1353 = vweird.f32 %v1347
    %vm1354 = vmor %vm1352, %vm1353
    %v1355 = vsel %vm1354, %v1347, %v1351
    %v1356 = vand.u32 2147483647, %v1301
    %vm1357 = vcmp.eq.f32.partialorder %v1356, 8.507059e+37
    %v1358 = vand.u32 %v1301, 2147483648
    %v1359 = vor.u32 1.1754944e-38, %v1358
    %v1360 = vsel %vm1357, %v1359, %v1355
    %v1361 = vmul.f32 1.0, %v1360
    %v1362 = vtanh.pop %v1282
    %v1363 = vtanh.pop %v1283
    %v1364 = vtanh.pop %v1284
    %v1365 = vtanh.pop %v1285
    %v1370 = vrot.slane %v1191, 7
    %v1371 = vrot.slane %v1192, 7
    %v1372 = vrot.slane %v1193, 7
    %v1373 = vrot.slane %v1194, 7
    %v1378 = vmul.f32 %v1316, %v1370
    %v1379 = vmul.f32 %v1331, %v1371
    %v1380 = vmul.f32 %v1346, %v1372
    %v1381 = vmul.f32 %v1361, %v1373
    %1386 = vrot.lane.b32.xlu0 %v1362, 64
    %v1387 = vpop.permute.xlu0 %1386
    %1388 = vrot.lane.b32.xlu0 %v1363, 64
    %v1389 = vpop.permute.xlu0 %1388
    %1390 = vrot.lane.b32.xlu0 %v1364, 64
    %v1391 = vpop.permute.xlu0 %1390
    %1392 = vrot.lane.b32.xlu0 %v1365, 64
    %v1393 = vpop.permute.xlu0 %1392
    %v1398 = vmul.f32 %v1316, %v1387
    %v1399 = vmul.f32 %v1331, %v1389
    %v1400 = vmul.f32 %v1346, %v1391
    %v1401 = vmul.f32 %v1361, %v1393
    %1406 = vrot.lane.b32.xlu0 %v1398, 32
    %v1407 = vpop.permute.xlu0 %1406
    %1408 = vrot.lane.b32.xlu0 %v1399, 32
    %v1409 = vpop.permute.xlu0 %1408
    %1410 = vrot.lane.b32.xlu0 %v1400, 32
    %v1411 = vpop.permute.xlu0 %1410
    %1412 = vrot.lane.b32.xlu0 %v1401, 32
    %v1413 = vpop.permute.xlu0 %1412
    %v1418 = vadd.f32 %v1378, %v1407
    %v1419 = vadd.f32 %v1379, %v1409
    %v1420 = vadd.f32 %v1380, %v1411
    %v1421 = vadd.f32 %v1381, %v1413
    %v1422 = vtanh.pop %v1418
    %v1423 = vtanh.pop %v1419
    %v1424 = vtanh.pop %v1420
    %v1425 = vtanh.pop %v1421
    %1430 = vrot.lane.b32.xlu0 %v1422, 64
    %v1431 = vpop.permute.xlu0 %1430
    %1432 = vrot.lane.b32.xlu0 %v1423, 64
    %v1433 = vpop.permute.xlu0 %1432
    %1434 = vrot.lane.b32.xlu0 %v1424, 64
    %v1435 = vpop.permute.xlu0 %1434
    %1436 = vrot.lane.b32.xlu0 %v1425, 64
    %v1437 = vpop.permute.xlu0 %1436
    %v1442 = vmul.f32 %v1316, %v1431
    %v1443 = vmul.f32 %v1331, %v1433
    %v1444 = vmul.f32 %v1346, %v1435
    %v1445 = vmul.f32 %v1361, %v1437
    %vm1446 = vcmp.gt.s32.totalorder %v77, 5
    %v1447 = vsel %vm1446, 1, 0
    %1448 = vset.pattern.permute.xlu0 0
    %1449 = vperm.xlu0 %1448, %v1447
    %v1450 = vpop.permute.xlu0 %1449
    %vm1451 = vcmp.eq.s32.totalorder %v1450, 1
    %v1456 = vrot.slane %v1442, 5
    %v1457 = vrot.slane %v1443, 4
    %v1458 = vsel %vm325, %v1457, %v1456
    %v1459 = vrot.slane %v1444, 3
    %v1460 = vsel %vm328, %v1459, %v1458
    %v1461 = vrot.slane %v1445, 2
    %v1462 = vsel %vm331, %v1461, %v1460
    %1463 = vrot.lane.b32.xlu0 %v1462, 32
    %v1464 = vpop.permute.xlu0 %1463
    %v1466 = vsel %vm1451, %v1464, 0.0
    %v1468 = vrot.slane %v1466, 1
    %v1469 = vrot.slane %v1466, 2
    %v1470 = vrot.slane %v1466, 3
    %1474 = vst.msk [vmem:[#allocation8 + $0x5] sm:$0x1] %vm344, %v1466
    %1475 = vst.msk [vmem:[#allocation8 + $0xd] sm:$0x1] %vm344, %v1468
    %1476 = vst.msk [vmem:[#allocation8 + $0x15] sm:$0x1] %vm344, %v1469
    %1477 = vst.msk [vmem:[#allocation8 + $0x1d] sm:$0x1] %vm344, %v1470
    %v1478 = vsel %vm82, %v1464, 0
    %1480 = vmatpush.msra.mxu0 0.0
    %1481 = vmatpush.msra.mxu0 0.0
    %1482 = vmatpush.msra.mxu0 0.0
    %1483 = vmatpush.msra.mxu0 0.0
    %1484 = vmatpush.msra.mxu0 0.0
    %1485 = vmatpush.msra.mxu0 0.0
    %1486 = vmatpush.msra.mxu0 0.0
    %1487 = vmatpush.msra.mxu0 0.0
    %1488 = vmatpush.msra.mxu0 0.0
    %1489 = vmatpush.msra.mxu0 0.0
    %1490 = vmatpush.msra.mxu0 0.0
    %1491 = vmatpush.msra.mxu0 0.0
    %1492 = vmatpush.msra.mxu0 %v75
    %1493 = vmatpush.msra.mxu0 %v74
    %1494 = vmatpush.msra.mxu0 %v73
    %1495 = vmatpush.msra.mxu0 %v72
    %1496 = vmatmul.f32.gmra.mxu0 %v1478
    %v1497 = vpop.f32.mrf.mxu0
    %v1498 = vadd.f32 0.0, %v1497
    %1499 = vdwg.mxu0
    %v1501 = vrot.slane %v1498, 2
    %v1502 = vrot.slane %v1498, 3
    %v1503 = vrot.slane %v1498, 4
    %v1504 = vrot.slane %v1498, 5
    %v1509 = vadd.f32 %v127, %v1501
    %v1510 = vadd.f32 %v128, %v1502
    %v1511 = vadd.f32 %v129, %v1503
    %v1512 = vadd.f32 %v130, %v1504
    %v1513 = vxor.u32 %v1509, 2147483648
    %v1514 = vxor.u32 %v1510, 2147483648
    %v1515 = vxor.u32 %v1511, 2147483648
    %v1516 = vxor.u32 %v1512, 2147483648
    %v1517 = vmul.f32 %v1513, 1.442695
    %v1518 = vpow.pop %v1517
    %v1519 = vmul.f32 %v1514, 1.442695
    %v1520 = vpow.pop %v1519
    %v1521 = vmul.f32 %v1515, 1.442695
    %v1522 = vpow.pop %v1521
    %v1523 = vmul.f32 %v1516, 1.442695
    %v1524 = vpow.pop %v1523
    %v1525 = vadd.f32 %v1518, 1.0
    %v1526 = vadd.f32 %v1520, 1.0
    %v1527 = vadd.f32 %v1522, 1.0
    %v1528 = vadd.f32 %v1524, 1.0
    %v1529 = vrcp.pop %v1525
    %v1530 = vmul.f32 %v1525, %v1529
    %v1531 = vsub.f32 1.0, %v1530
    %v1532 = vmul.f32 %v1529, %v1531
    %v1533 = vadd.f32 %v1529, %v1532
    %vm1534 = vweird.f32 %v1525
    %vm1535 = vweird.f32 %v1529
    %vm1536 = vmor %vm1534, %vm1535
    %v1537 = vsel %vm1536, %v1529, %v1533
    %v1538 = vand.u32 2147483647, %v1525
    %vm1539 = vcmp.eq.f32.partialorder %v1538, 8.507059e+37
    %v1540 = vand.u32 %v1525, 2147483648
    %v1541 = vor.u32 1.1754944e-38, %v1540
    %v1542 = vsel %vm1539, %v1541, %v1537
    %v1543 = vmul.f32 1.0, %v1542
    %v1544 = vrcp.pop %v1526
    %v1545 = vmul.f32 %v1526, %v1544
    %v1546 = vsub.f32 1.0, %v1545
    %v1547 = vmul.f32 %v1544, %v1546
    %v1548 = vadd.f32 %v1544, %v1547
    %vm1549 = vweird.f32 %v1526
    %vm1550 = vweird.f32 %v1544
    %vm1551 = vmor %vm1549, %vm1550
    %v1552 = vsel %vm1551, %v1544, %v1548
    %v1553 = vand.u32 2147483647, %v1526
    %vm1554 = vcmp.eq.f32.partialorder %v1553, 8.507059e+37
    %v1555 = vand.u32 %v1526, 2147483648
    %v1556 = vor.u32 1.1754944e-38, %v1555
    %v1557 = vsel %vm1554, %v1556, %v1552
    %v1558 = vmul.f32 1.0, %v1557
    %v1559 = vrcp.pop %v1527
    %v1560 = vmul.f32 %v1527, %v1559
    %v1561 = vsub.f32 1.0, %v1560
    %v1562 = vmul.f32 %v1559, %v1561
    %v1563 = vadd.f32 %v1559, %v1562
    %vm1564 = vweird.f32 %v1527
    %vm1565 = vweird.f32 %v1559
    %vm1566 = vmor %vm1564, %vm1565
    %v1567 = vsel %vm1566, %v1559, %v1563
    %v1568 = vand.u32 2147483647, %v1527
    %vm1569 = vcmp.eq.f32.partialorder %v1568, 8.507059e+37
    %v1570 = vand.u32 %v1527, 2147483648
    %v1571 = vor.u32 1.1754944e-38, %v1570
    %v1572 = vsel %vm1569, %v1571, %v1567
    %v1573 = vmul.f32 1.0, %v1572
    %v1574 = vrcp.pop %v1528
    %v1575 = vmul.f32 %v1528, %v1574
    %v1576 = vsub.f32 1.0, %v1575
    %v1577 = vmul.f32 %v1574, %v1576
    %v1578 = vadd.f32 %v1574, %v1577
    %vm1579 = vweird.f32 %v1528
    %vm1580 = vweird.f32 %v1574
    %vm1581 = vmor %vm1579, %vm1580
    %v1582 = vsel %vm1581, %v1574, %v1578
    %v1583 = vand.u32 2147483647, %v1528
    %vm1584 = vcmp.eq.f32.partialorder %v1583, 8.507059e+37
    %v1585 = vand.u32 %v1528, 2147483648
    %v1586 = vor.u32 1.1754944e-38, %v1585
    %v1587 = vsel %vm1584, %v1586, %v1582
    %v1588 = vmul.f32 1.0, %v1587
    %v1589 = vtanh.pop %v1509
    %v1590 = vtanh.pop %v1510
    %v1591 = vtanh.pop %v1511
    %v1592 = vtanh.pop %v1512
    %v1597 = vrot.slane %v1418, 7
    %v1598 = vrot.slane %v1419, 7
    %v1599 = vrot.slane %v1420, 7
    %v1600 = vrot.slane %v1421, 7
    %v1605 = vmul.f32 %v1543, %v1597
    %v1606 = vmul.f32 %v1558, %v1598
    %v1607 = vmul.f32 %v1573, %v1599
    %v1608 = vmul.f32 %v1588, %v1600
    %1613 = vrot.lane.b32.xlu0 %v1589, 64
    %v1614 = vpop.permute.xlu0 %1613
    %1615 = vrot.lane.b32.xlu0 %v1590, 64
    %v1616 = vpop.permute.xlu0 %1615
    %1617 = vrot.lane.b32.xlu0 %v1591, 64
    %v1618 = vpop.permute.xlu0 %1617
    %1619 = vrot.lane.b32.xlu0 %v1592, 64
    %v1620 = vpop.permute.xlu0 %1619
    %v1625 = vmul.f32 %v1543, %v1614
    %v1626 = vmul.f32 %v1558, %v1616
    %v1627 = vmul.f32 %v1573, %v1618
    %v1628 = vmul.f32 %v1588, %v1620
    %1633 = vrot.lane.b32.xlu0 %v1625, 32
    %v1634 = vpop.permute.xlu0 %1633
    %1635 = vrot.lane.b32.xlu0 %v1626, 32
    %v1636 = vpop.permute.xlu0 %1635
    %1637 = vrot.lane.b32.xlu0 %v1627, 32
    %v1638 = vpop.permute.xlu0 %1637
    %1639 = vrot.lane.b32.xlu0 %v1628, 32
    %v1640 = vpop.permute.xlu0 %1639
    %v1645 = vadd.f32 %v1605, %v1634
    %v1646 = vadd.f32 %v1606, %v1636
    %v1647 = vadd.f32 %v1607, %v1638
    %v1648 = vadd.f32 %v1608, %v1640
    %v1649 = vtanh.pop %v1645
    %v1650 = vtanh.pop %v1646
    %v1651 = vtanh.pop %v1647
    %v1652 = vtanh.pop %v1648
    %1657 = vrot.lane.b32.xlu0 %v1649, 64
    %v1658 = vpop.permute.xlu0 %1657
    %1659 = vrot.lane.b32.xlu0 %v1650, 64
    %v1660 = vpop.permute.xlu0 %1659
    %1661 = vrot.lane.b32.xlu0 %v1651, 64
    %v1662 = vpop.permute.xlu0 %1661
    %1663 = vrot.lane.b32.xlu0 %v1652, 64
    %v1664 = vpop.permute.xlu0 %1663
    %v1669 = vmul.f32 %v1543, %v1658
    %v1670 = vmul.f32 %v1558, %v1660
    %v1671 = vmul.f32 %v1573, %v1662
    %v1672 = vmul.f32 %v1588, %v1664
    %vm1673 = vcmp.gt.s32.totalorder %v77, 6
    %v1674 = vsel %vm1673, 1, 0
    %1675 = vset.pattern.permute.xlu0 0
    %1676 = vperm.xlu0 %1675, %v1674
    %v1677 = vpop.permute.xlu0 %1676
    %vm1678 = vcmp.eq.s32.totalorder %v1677, 1
    %v1683 = vrot.slane %v1669, 6
    %v1684 = vrot.slane %v1670, 5
    %v1685 = vsel %vm325, %v1684, %v1683
    %v1686 = vrot.slane %v1671, 4
    %v1687 = vsel %vm328, %v1686, %v1685
    %v1688 = vrot.slane %v1672, 3
    %v1689 = vsel %vm331, %v1688, %v1687
    %1690 = vrot.lane.b32.xlu0 %v1689, 32
    %v1691 = vpop.permute.xlu0 %1690
    %v1693 = vsel %vm1678, %v1691, 0.0
    %v1695 = vrot.slane %v1693, 1
    %v1696 = vrot.slane %v1693, 2
    %v1697 = vrot.slane %v1693, 3
    %1701 = vst.msk [vmem:[#allocation8 + $0x6] sm:$0x1] %vm344, %v1693
    %1702 = vst.msk [vmem:[#allocation8 + $0xe] sm:$0x1] %vm344, %v1695
    %1703 = vst.msk [vmem:[#allocation8 + $0x16] sm:$0x1] %vm344, %v1696
    %1704 = vst.msk [vmem:[#allocation8 + $0x1e] sm:$0x1] %vm344, %v1697
    %v1705 = vsel %vm82, %v1691, 0
    %1707 = vmatpush.msra.mxu0 0.0
    %1708 = vmatpush.msra.mxu0 0.0
    %1709 = vmatpush.msra.mxu0 0.0
    %1710 = vmatpush.msra.mxu0 0.0
    %1711 = vmatpush.msra.mxu0 0.0
    %1712 = vmatpush.msra.mxu0 0.0
    %1713 = vmatpush.msra.mxu0 0.0
    %1714 = vmatpush.msra.mxu0 0.0
    %1715 = vmatpush.msra.mxu0 0.0
    %1716 = vmatpush.msra.mxu0 0.0
    %1717 = vmatpush.msra.mxu0 0.0
    %1718 = vmatpush.msra.mxu0 0.0
    %1719 = vmatpush.msra.mxu0 %v75
    %1720 = vmatpush.msra.mxu0 %v74
    %1721 = vmatpush.msra.mxu0 %v73
    %1722 = vmatpush.msra.mxu0 %v72
    %1723 = vmatmul.f32.gmra.mxu0 %v1705
    %v1724 = vpop.f32.mrf.mxu0
    %v1725 = vadd.f32 0.0, %v1724
    %1726 = vdwg.mxu0
    %v1728 = vrot.slane %v1725, 1
    %v1729 = vrot.slane %v1725, 2
    %v1730 = vrot.slane %v1725, 3
    %v1731 = vrot.slane %v1725, 4
    %v1736 = vadd.f32 %v127, %v1728
    %v1737 = vadd.f32 %v128, %v1729
    %v1738 = vadd.f32 %v129, %v1730
    %v1739 = vadd.f32 %v130, %v1731
    %v1740 = vxor.u32 %v1736, 2147483648
    %v1741 = vxor.u32 %v1737, 2147483648
    %v1742 = vxor.u32 %v1738, 2147483648
    %v1743 = vxor.u32 %v1739, 2147483648
    %v1744 = vmul.f32 %v1740, 1.442695
    %v1745 = vpow.pop %v1744
    %v1746 = vmul.f32 %v1741, 1.442695
    %v1747 = vpow.pop %v1746
    %v1748 = vmul.f32 %v1742, 1.442695
    %v1749 = vpow.pop %v1748
    %v1750 = vmul.f32 %v1743, 1.442695
    %v1751 = vpow.pop %v1750
    %v1752 = vadd.f32 %v1745, 1.0
    %v1753 = vadd.f32 %v1747, 1.0
    %v1754 = vadd.f32 %v1749, 1.0
    %v1755 = vadd.f32 %v1751, 1.0
    %v1756 = vrcp.pop %v1752
    %v1757 = vmul.f32 %v1752, %v1756
    %v1758 = vsub.f32 1.0, %v1757
    %v1759 = vmul.f32 %v1756, %v1758
    %v1760 = vadd.f32 %v1756, %v1759
    %vm1761 = vweird.f32 %v1752
    %vm1762 = vweird.f32 %v1756
    %vm1763 = vmor %vm1761, %vm1762
    %v1764 = vsel %vm1763, %v1756, %v1760
    %v1765 = vand.u32 2147483647, %v1752
    %vm1766 = vcmp.eq.f32.partialorder %v1765, 8.507059e+37
    %v1767 = vand.u32 %v1752, 2147483648
    %v1768 = vor.u32 1.1754944e-38, %v1767
    %v1769 = vsel %vm1766, %v1768, %v1764
    %v1770 = vmul.f32 1.0, %v1769
    %v1771 = vrcp.pop %v1753
    %v1772 = vmul.f32 %v1753, %v1771
    %v1773 = vsub.f32 1.0, %v1772
    %v1774 = vmul.f32 %v1771, %v1773
    %v1775 = vadd.f32 %v1771, %v1774
    %vm1776 = vweird.f32 %v1753
    %vm1777 = vweird.f32 %v1771
    %vm1778 = vmor %vm1776, %vm1777
    %v1779 = vsel %vm1778, %v1771, %v1775
    %v1780 = vand.u32 2147483647, %v1753
    %vm1781 = vcmp.eq.f32.partialorder %v1780, 8.507059e+37
    %v1782 = vand.u32 %v1753, 2147483648
    %v1783 = vor.u32 1.1754944e-38, %v1782
    %v1784 = vsel %vm1781, %v1783, %v1779
    %v1785 = vmul.f32 1.0, %v1784
    %v1786 = vrcp.pop %v1754
    %v1787 = vmul.f32 %v1754, %v1786
    %v1788 = vsub.f32 1.0, %v1787
    %v1789 = vmul.f32 %v1786, %v1788
    %v1790 = vadd.f32 %v1786, %v1789
    %vm1791 = vweird.f32 %v1754
    %vm1792 = vweird.f32 %v1786
    %vm1793 = vmor %vm1791, %vm1792
    %v1794 = vsel %vm1793, %v1786, %v1790
    %v1795 = vand.u32 2147483647, %v1754
    %vm1796 = vcmp.eq.f32.partialorder %v1795, 8.507059e+37
    %v1797 = vand.u32 %v1754, 2147483648
    %v1798 = vor.u32 1.1754944e-38, %v1797
    %v1799 = vsel %vm1796, %v1798, %v1794
    %v1800 = vmul.f32 1.0, %v1799
    %v1801 = vrcp.pop %v1755
    %v1802 = vmul.f32 %v1755, %v1801
    %v1803 = vsub.f32 1.0, %v1802
    %v1804 = vmul.f32 %v1801, %v1803
    %v1805 = vadd.f32 %v1801, %v1804
    %vm1806 = vweird.f32 %v1755
    %vm1807 = vweird.f32 %v1801
    %vm1808 = vmor %vm1806, %vm1807
    %v1809 = vsel %vm1808, %v1801, %v1805
    %v1810 = vand.u32 2147483647, %v1755
    %vm1811 = vcmp.eq.f32.partialorder %v1810, 8.507059e+37
    %v1812 = vand.u32 %v1755, 2147483648
    %v1813 = vor.u32 1.1754944e-38, %v1812
    %v1814 = vsel %vm1811, %v1813, %v1809
    %v1815 = vmul.f32 1.0, %v1814
    %v1816 = vtanh.pop %v1736
    %v1817 = vtanh.pop %v1737
    %v1818 = vtanh.pop %v1738
    %v1819 = vtanh.pop %v1739
    %v1824 = vrot.slane %v1645, 7
    %v1825 = vrot.slane %v1646, 7
    %v1826 = vrot.slane %v1647, 7
    %v1827 = vrot.slane %v1648, 7
    %v1832 = vmul.f32 %v1770, %v1824
    %v1833 = vmul.f32 %v1785, %v1825
    %v1834 = vmul.f32 %v1800, %v1826
    %v1835 = vmul.f32 %v1815, %v1827
    %1840 = vrot.lane.b32.xlu0 %v1816, 64
    %v1841 = vpop.permute.xlu0 %1840
    %1842 = vrot.lane.b32.xlu0 %v1817, 64
    %v1843 = vpop.permute.xlu0 %1842
    %1844 = vrot.lane.b32.xlu0 %v1818, 64
    %v1845 = vpop.permute.xlu0 %1844
    %1846 = vrot.lane.b32.xlu0 %v1819, 64
    %v1847 = vpop.permute.xlu0 %1846
    %v1852 = vmul.f32 %v1770, %v1841
    %v1853 = vmul.f32 %v1785, %v1843
    %v1854 = vmul.f32 %v1800, %v1845
    %v1855 = vmul.f32 %v1815, %v1847
    %1860 = vrot.lane.b32.xlu0 %v1852, 32
    %v1861 = vpop.permute.xlu0 %1860
    %1862 = vrot.lane.b32.xlu0 %v1853, 32
    %v1863 = vpop.permute.xlu0 %1862
    %1864 = vrot.lane.b32.xlu0 %v1854, 32
    %v1865 = vpop.permute.xlu0 %1864
    %1866 = vrot.lane.b32.xlu0 %v1855, 32
    %v1867 = vpop.permute.xlu0 %1866
    %v1872 = vadd.f32 %v1832, %v1861
    %v1873 = vadd.f32 %v1833, %v1863
    %v1874 = vadd.f32 %v1834, %v1865
    %v1875 = vadd.f32 %v1835, %v1867
    %v1876 = vtanh.pop %v1872
    %v1877 = vtanh.pop %v1873
    %v1878 = vtanh.pop %v1874
    %v1879 = vtanh.pop %v1875
    %1884 = vrot.lane.b32.xlu0 %v1876, 64
    %v1885 = vpop.permute.xlu0 %1884
    %1886 = vrot.lane.b32.xlu0 %v1877, 64
    %v1887 = vpop.permute.xlu0 %1886
    %1888 = vrot.lane.b32.xlu0 %v1878, 64
    %v1889 = vpop.permute.xlu0 %1888
    %1890 = vrot.lane.b32.xlu0 %v1879, 64
    %v1891 = vpop.permute.xlu0 %1890
    %v1896 = vmul.f32 %v1770, %v1885
    %v1897 = vmul.f32 %v1785, %v1887
    %v1898 = vmul.f32 %v1800, %v1889
    %v1899 = vmul.f32 %v1815, %v1891
    %vm1900 = vcmp.gt.s32.totalorder %v77, 7
    %v1901 = vsel %vm1900, 1, 0
    %1902 = vset.pattern.permute.xlu0 0
    %1903 = vperm.xlu0 %1902, %v1901
    %v1904 = vpop.permute.xlu0 %1903
    %vm1905 = vcmp.eq.s32.totalorder %v1904, 1
    %v1910 = vrot.slane %v1896, 7
    %v1911 = vrot.slane %v1897, 6
    %v1912 = vsel %vm325, %v1911, %v1910
    %v1913 = vrot.slane %v1898, 5
    %v1914 = vsel %vm328, %v1913, %v1912
    %v1915 = vrot.slane %v1899, 4
    %v1916 = vsel %vm331, %v1915, %v1914
    %1917 = vrot.lane.b32.xlu0 %v1916, 32
    %v1918 = vpop.permute.xlu0 %1917
    %v1920 = vsel %vm1905, %v1918, 0.0
    %v1922 = vrot.slane %v1920, 1
    %v1923 = vrot.slane %v1920, 2
    %v1924 = vrot.slane %v1920, 3
    %1928 = vst.msk [vmem:[#allocation8 + $0x7] sm:$0x1] %vm344, %v1920
    %1929 = vst.msk [vmem:[#allocation8 + $0xf] sm:$0x1] %vm344, %v1922
    %1930 = vst.msk [vmem:[#allocation8 + $0x17] sm:$0x1] %vm344, %v1923
    %1931 = vst.msk [vmem:[#allocation8 + $0x1f] sm:$0x1] %vm344, %v1924
    // Predicated region
    $region34: #{tpu_custom_call.1} parent=1 // pred_check
      _
    $region35: #{tpu_custom_call.1} parent=1 // pred_check_branch
      %1933 = sbr.rel (0) target = $region37
    $region36: #{tpu_custom_call.1} parent=1 // pred_region
      %1935 = vsyncadd [#allocation4], 0
      %s1936 = sshll.u32 [#allocation8], 4
      %s1937 = int_to_ptr.vmem [resolvable:$true] %s1936
      %s1938 = sshll.u32 %s5, 4
      %s1939 = int_to_ptr.hbm [resolvable:$true] %s1938
      %1944 = dma.vmem_to_hbm [thread:$0]  %s1937, 512, %s1939, [#allocation4], 128, 128, 8
    $region37: #{tpu_custom_call.1} parent=1 // pred_fallthru
      _
    // Predicated region
    $region38: #{tpu_custom_call.1} parent=1 // pred_check
      _
    $region39: #{tpu_custom_call.1} parent=1 // pred_check_branch
      %1946 = sbr.rel (0) target = $region41
    $region40: #{tpu_custom_call.1} parent=1 // pred_region
      %1948 = dma.done [#allocation4], 512
    $region41: #{tpu_custom_call.1} parent=1 // pred_fallthru
      _
    %1949 = vsyncpa [#allocation3], 1
    %1950 = vsyncpa [#allocation6], 1
    %1951 = vsyncpa [#allocation4], 1

</llo_original>
